<compile_context>
chip_gen: v5e
topology: v5e:2x2
jax: 0.10.0
libtpu: 0.0.40
codegen_flags: <defaults>
</compile_context>

<pallas_src>
import functools

import jax
import jax.numpy as jnp
from jax import lax
from jax.experimental import pallas as pl
from jax.experimental.pallas import tpu as pltpu

_LANES = 128
_INT32_MIN = jnp.iinfo(jnp.int32).min


def _pow_static(x, p):
    """x ** p for a static exponent p.

    Integer exponents use repeated squaring (pure VPU multiplies, no EUP
    transcendentals); p == 1 is the identity.  Non-integer exponents fall back
    to exp(p * log(x)) for x > 0.
    """
    p = float(p)
    if p == 1.0:
        return x
    if p == round(p) and 0.0 <= p <= 32.0:
        n = int(p)
        if n == 0:
            return jnp.ones_like(x)
        result = None
        base = x
        while n:
            if n & 1:
                result = base if result is None else result * base
            n >>= 1
            if n:
                base = base * base
        return result
    # TODO(synk): fractional exponents fall back to exp(p*log(x)) with an
    # explicit x<=0 -> 0 branch (torch.pow returns NaN on negative bases).
    return jnp.where(x > 0.0,
                     jnp.exp(p * jnp.log(jnp.maximum(x, 1e-30))),
                     jnp.zeros_like(x))


def _sortable_i32(x):
    """Order-preserving f32 -> int32 map (total order for non-NaN inputs)."""
    bits = lax.bitcast_convert_type(x, jnp.int32)
    mag = jnp.bitwise_and(bits, jnp.int32(0x7FFFFFFF))
    return jnp.where(bits >= 0, bits, -mag)


def _pack_value_index(values, rev_index, index_bits):
    """Pack (value, reversed index) into ONE sortable int32 key.

    A single max reduction over packed keys gives both the max value and
    (because the low index bits make each key unique) exactly one argmax
    position, with ties broken towards the lowest original index.  The value
    ordering is truncated by `index_bits` mantissa bits (~2**-16 relative for
    the anchor axis here), which only affects near-exact ties.
    """
    keys = jnp.bitwise_and(_sortable_i32(values), jnp.int32(-(1 << index_bits)))
    return jnp.bitwise_or(keys, rev_index)


def _assign_core(ps_t, pb_t, ap_t, gl, gb, pm, *,
                 topk, alpha, beta, eps, bg_index, a_real):
    """Per-batch assignment math (identical inside Pallas and under vmap).

    ps_t : [C, A] bf16  pred class scores (class-major, A padded to 128 lanes)
    pb_t : [4, A] f32   pred boxes xyxy (coord-major)
    ap_t : [2, A] f32   anchor points xy (coord-major)
    gl   : [M, 1] i32   gt labels
    gb   : [M, 4] f32   gt boxes xyxy
    pm   : [M, 1] f32   pad-gt mask (1 = valid gt)
    a_real : static number of real (unpadded) anchors (a_real <= A)
    """
    f32 = jnp.float32
    C, A = ps_t.shape
    M = gb.shape[0]

    # --- hoisted broadcasts: each gt coordinate is reused by the IoU and the
    #     anchor-in-gt blocks, so broadcast [M,1] -> [M,A] exactly once.
    gx1s, gy1s, gx2s, gy2s = gb[:, 0:1], gb[:, 1:2], gb[:, 2:3], gb[:, 3:4]  # [M,1]
    gx1 = jnp.broadcast_to(gx1s, (M, A))
    gy1 = jnp.broadcast_to(gy1s, (M, A))
    gx2 = jnp.broadcast_to(gx2s, (M, A))
    gy2 = jnp.broadcast_to(gy2s, (M, A))
    px1, py1, px2, py2 = pb_t[0:1, :], pb_t[1:2, :], pb_t[2:3, :], pb_t[3:4, :]  # [1,A]

    # ---- IoU(gt, pred): [M, A] ------------------------------------------------
    overlap = (jnp.maximum(jnp.minimum(gx2, px2) - jnp.maximum(gx1, px1), 0.0) *
               jnp.maximum(jnp.minimum(gy2, py2) - jnp.maximum(gy1, py1), 0.0))
    area_g = jnp.maximum(gx2s - gx1s, 0.0) * jnp.maximum(gy2s - gy1s, 0.0)    # [M,1]
    area_p = jnp.maximum(px2 - px1, 0.0) * jnp.maximum(py2 - py1, 0.0)        # [1,A]
    ious = overlap / (area_g + area_p - overlap + 1e-9)                        # [M,A]

    # ---- bbox_cls_scores[m, a] = pred_scores[a, gt_label[m]] via one-hot matmul
    cls_iota = lax.broadcasted_iota(jnp.int32, (M, C), 1)
    onehot_lbl = jnp.where(gl == cls_iota, 1.0, 0.0).astype(ps_t.dtype)        # [M,C]
    bbox_cls_scores = jnp.dot(onehot_lbl, ps_t, preferred_element_type=f32)    # [M,A]

    # ---- alignment metric: score**alpha * iou**beta (repeated squaring) -------
    align = _pow_static(bbox_cls_scores, alpha) * _pow_static(ious, beta)      # [M,A]

    # ---- anchor point inside gt box -------------------------------------------
    apx, apy = ap_t[0:1, :], ap_t[1:2, :]                                      # [1,A]
    min_ltrb = jnp.minimum(jnp.minimum(apx - gx1, apy - gy1),
                           jnp.minimum(gx2 - apx, gy2 - apy))
    is_in_gts = (min_ltrb > 1e-9).astype(f32)                                  # [M,A]

    # padded anchor columns (a_real <= A) must never participate
    col_valid = None
    if a_real < A:
        col_valid = lax.broadcasted_iota(jnp.int32, (1, A), 1) < a_real        # [1,A]

    # ---- top-k along anchors: k-th-threshold search over packed keys ----------
    col_iota = lax.broadcasted_iota(jnp.int32, (M, A), 1)
    a_bits = max(1, (A - 1).bit_length())
    masked_metric = align * is_in_gts
    if col_valid is not None:
        masked_metric = jnp.where(col_valid, masked_metric, -jnp.inf)
    packed_metric = _pack_value_index(masked_metric, (A - 1) - col_iota, a_bits)

    def topk_body(_, carry):
        packed, _ = carry
        kmax = jnp.max(packed, axis=-1, keepdims=True)                         # [M,1]
        packed = jnp.where(packed == kmax, _INT32_MIN, packed)                 # drop 1/row
        return packed, kmax

    _, kth_key = lax.fori_loop(
        0, topk, topk_body,
        (packed_metric, jnp.full((M, 1), _INT32_MIN, jnp.int32)),
        unroll=True)
    # keys are unique per row, so exactly `topk` anchors satisfy >= kth_key
    is_in_topk = (packed_metric >= kth_key).astype(f32)                        # [M,A]

    # ---- positive mask + multi-gt resolution ----------------------------------
    pmb = jnp.broadcast_to(pm, (M, A))
    mask_positive = is_in_topk * is_in_gts * pmb                               # [M,A]
    if col_valid is not None:
        mask_positive = jnp.where(col_valid, mask_positive, 0.0)
    mask_positive_sum = jnp.sum(mask_positive, axis=0, keepdims=True)          # [1,A]

    row_iota = lax.broadcasted_iota(jnp.int32, (M, A), 0)
    if M > 1:
        # argmax of ious over the gt axis, fused into a single sublane max
        m_bits = max(1, (M - 1).bit_length())
        packed_iou = _pack_value_index(ious, (M - 1) - row_iota, m_bits)
        is_max_iou = (packed_iou ==
                      jnp.max(packed_iou, axis=0, keepdims=True)).astype(f32)  # one-hot/col

        multi = mask_positive_sum > 1.0
        mask_positive = jnp.where(multi, is_max_iou, mask_positive)
        # is_max_iou is one-hot per column, so the new per-column sum is exactly 1:
        # no need to re-reduce the whole [M, A] matrix a second time.
        mask_positive_sum = jnp.where(multi, 1.0, mask_positive_sum)
    # (M == 1: per-column positive count can never exceed 1 -> skip entirely)

    # ---- fused (first positive gt row, its label) via one min reduction -------
    lbl_bits = max(1, (C - 1).bit_length())
    gl_b = jnp.broadcast_to(gl, (M, A))
    key_pos = jnp.where(mask_positive > 0.5,
                        row_iota * (1 << lbl_bits) + gl_b,
                        M * (1 << lbl_bits))
    first_key = jnp.min(key_pos, axis=0, keepdims=True)                        # [1,A]
    has_pos = mask_positive_sum > 0.0
    assigned_gt_index = jnp.where(has_pos,
                                  jnp.right_shift(first_key, lbl_bits), 0)
    assigned_labels = jnp.where(has_pos,
                                jnp.bitwise_and(first_key, (1 << lbl_bits) - 1),
                                bg_index)

    # ---- per-anchor normalized alignment metric -------------------------------
    am = align * mask_positive
    max_metrics_per_inst = jnp.max(am, axis=-1, keepdims=True)                 # [M,1]
    max_ious_per_inst = jnp.max(ious * mask_positive, axis=-1, keepdims=True)  # [M,1]
    am = am * (max_ious_per_inst / (max_metrics_per_inst + eps))
    per_anchor_metric = jnp.max(am, axis=0, keepdims=True)                     # [1,A]

    return (assigned_gt_index.astype(jnp.int32),
            assigned_labels.astype(jnp.int32),
            per_anchor_metric.astype(f32))


def _assigner_kernel(ps_ref, pb_ref, ap_ref, gl_ref, gb_ref, pm_ref,
                     idx_ref, lab_ref, met_ref,
                     *, topk, alpha, beta, eps, bg_index, a_real):
    gt_idx, labels, metric = _assign_core(
        ps_ref[0], pb_ref[0], ap_ref[...], gl_ref[0], gb_ref[0], pm_ref[0],
        topk=topk, alpha=alpha, beta=beta, eps=eps, bg_index=bg_index,
        a_real=a_real)
    idx_ref[0] = gt_idx
    lab_ref[0] = labels
    met_ref[0] = metric


def _prepare_inputs(pred_scores, pred_bboxes, anchor_points, gt_labels,
                    gt_bboxes, pad_gt_mask):
    """Layout + dtype prep shared by the Pallas path and the JAX reference."""
    B, A, C = pred_scores.shape
    M = gt_bboxes.shape[1]
    a_pad = ((A + _LANES - 1) // _LANES) * _LANES

    ps_t = jnp.transpose(pred_scores, (0, 2, 1)).astype(jnp.bfloat16)   # [B,C,A]
    pb_t = jnp.transpose(pred_bboxes, (0, 2, 1)).astype(jnp.float32)    # [B,4,A]
    ap_t = jnp.transpose(anchor_points, (1, 0)).astype(jnp.float32)     # [2,A]
    if a_pad != A:
        pad3 = ((0, 0), (0, 0), (0, a_pad - A))
        ps_t = jnp.pad(ps_t, pad3)
        pb_t = jnp.pad(pb_t, pad3)
        ap_t = jnp.pad(ap_t, ((0, 0), (0, a_pad - A)))

    gl = gt_labels.reshape(B, M, 1).astype(jnp.int32)
    gb = gt_bboxes.astype(jnp.float32)
    pm = pad_gt_mask.reshape(B, M, 1).astype(jnp.float32)
    return ps_t, pb_t, ap_t, gl, gb, pm, A, a_pad


def _glue(gt_idx, labels, metric, gt_bboxes_f32, bg_index, a_real):
    """Final tiny gathers / one-hot expansion (plain-JAX glue)."""
    B = gt_idx.shape[0]
    M = gt_bboxes_f32.shape[1]
    assigned_gt_index = gt_idx[:, 0, :a_real]                 # [B, A]
    assigned_labels = labels[:, 0, :a_real]                   # [B, A]
    per_anchor_metric = metric[:, 0, :a_real]                 # [B, A]

    batch_ind = jnp.arange(B, dtype=jnp.int32)[:, None]
    flat_idx = assigned_gt_index + batch_ind * M
    # NOTE: reproduces the reference code's `gt_bboxes.reshape([-1, 2])[idx]`
    # indexing exactly (which yields a [B, A, 2] tensor).
    assigned_bboxes = jnp.reshape(gt_bboxes_f32, (-1, 2))[flat_idx]

    # one_hot(labels, C+1)[:, :, :bg_index]  ==  (labels == arange(bg_index)):
    # build only the kept columns directly.
    cls_ids = jnp.arange(bg_index, dtype=jnp.int32)
    one_hot = (assigned_labels[..., None] == cls_ids).astype(jnp.float32)
    assigned_scores = one_hot * per_anchor_metric[..., None]
    return assigned_labels, assigned_bboxes, assigned_scores


class TaskAlignedAssigner:
    """JAX/Pallas port of the TOOD TaskAlignedAssigner forward pass."""

    def __init__(self, topk=13, alpha=1.0, beta=6.0, eps=1e-9, num_classes=80):
        self.topk = topk
        self.alpha = alpha
        self.beta = beta
        self.eps = eps
        self.num_classes = num_classes

    def __call__(self, pred_scores, pred_bboxes, anchor_points, num_anchors_list,
                 gt_labels, gt_bboxes, pad_gt_mask, bg_index, gt_scores=None):
        del num_anchors_list, gt_scores  # unused in this forward path
        B, A, C = pred_scores.shape
        M = gt_bboxes.shape[1]
        if M == 0:
            return (jnp.full((B, A), bg_index, jnp.int32),
                    jnp.zeros((B, A, 4), jnp.float32),
                    jnp.zeros((B, A, C), jnp.float32))

        ps_t, pb_t, ap_t, gl, gb, pm, a_real, a_pad = _prepare_inputs(
            pred_scores, pred_bboxes, anchor_points, gt_labels, gt_bboxes,
            pad_gt_mask)

        kern = functools.partial(
            _assigner_kernel, topk=self.topk, alpha=self.alpha, beta=self.beta,
            eps=self.eps, bg_index=int(bg_index), a_real=a_real)

        out_shapes = (jax.ShapeDtypeStruct((B, 1, a_pad), jnp.int32),
                      jax.ShapeDtypeStruct((B, 1, a_pad), jnp.int32),
                      jax.ShapeDtypeStruct((B, 1, a_pad), jnp.float32))

        # TODO(synk): for production detector sizes (A~8400, padded M~200),
        # tile the anchor axis (two-pass top-k threshold carried in scratch)
        # and use CORE_PARALLEL on v7x; one full-A block per batch step is
        # well within the VMEM budget at these shapes.
        gt_idx, labels, metric = pl.pallas_call(
            kern,
            out_shape=out_shapes,
            grid_spec=pltpu.PrefetchScalarGridSpec(
                num_scalar_prefetch=0,
                grid=(B,),
                in_specs=[
                    pl.BlockSpec((1, C, a_pad), lambda b: (b, 0, 0)),
                    pl.BlockSpec((1, 4, a_pad), lambda b: (b, 0, 0)),
                    pl.BlockSpec((2, a_pad), lambda b: (0, 0)),
                    pl.BlockSpec((1, M, 1), lambda b: (b, 0, 0)),
                    pl.BlockSpec((1, M, 4), lambda b: (b, 0, 0)),
                    pl.BlockSpec((1, M, 1), lambda b: (b, 0, 0)),
                ],
                out_specs=[
                    pl.BlockSpec((1, 1, a_pad), lambda b: (b, 0, 0)),
                    pl.BlockSpec((1, 1, a_pad), lambda b: (b, 0, 0)),
                    pl.BlockSpec((1, 1, a_pad), lambda b: (b, 0, 0)),
                ]),
            compiler_params=pltpu.CompilerParams(
                dimension_semantics=("parallel",),
                vmem_limit_bytes=48 * 1024 * 1024),
        )(ps_t, pb_t, ap_t, gl, gb, pm)

        return _glue(gt_idx, labels, metric, gb, int(bg_index), a_real)


def reference_forward(assigner, pred_scores, pred_bboxes, anchor_points,
                      gt_labels, gt_bboxes, pad_gt_mask, bg_index):
    """Pure-JAX (XLA) reference running the same math, for a sanity check."""
    ps_t, pb_t, ap_t, gl, gb, pm, a_real, _ = _prepare_inputs(
        pred_scores, pred_bboxes, anchor_points, gt_labels, gt_bboxes,
        pad_gt_mask)
    core = functools.partial(_assign_core, topk=assigner.topk,
                             alpha=assigner.alpha, beta=assigner.beta,
                             eps=assigner.eps, bg_index=int(bg_index),
                             a_real=a_real)
    gt_idx, labels, metric = jax.vmap(
        lambda a, b, c, d, e: core(a, b, ap_t, c, d, e))(ps_t, pb_t, gl, gb, pm)
    return _glue(gt_idx, labels, metric, gb, int(bg_index), a_real)


if __name__ == "__main__":
    key = jax.random.PRNGKey(0)
    B, A, C, M = 2, 64, 16, 8
    topk = 13
    bg_index = C

    k1, k2, k3, k4, k5, k6 = jax.random.split(key, 6)

    # 8x8 anchor grid over a 64x64 image (stride 8, centered).
    xs = (jnp.arange(8, dtype=jnp.float32) + 0.5) * 8.0
    gx, gy = jnp.meshgrid(xs, xs, indexing="xy")
    anchor_points = jnp.stack([gx.reshape(-1), gy.reshape(-1)], axis=-1)       # [A, 2]

    pred_scores = jax.nn.sigmoid(jax.random.normal(k1, (B, A, C)))             # [B, A, C]

    wh = jax.random.uniform(k2, (B, A, 2), minval=6.0, maxval=20.0)
    ctr = anchor_points[None] + jax.random.uniform(k3, (B, A, 2), minval=-3.0, maxval=3.0)
    pred_bboxes = jnp.concatenate([ctr - wh / 2, ctr + wh / 2], axis=-1)       # [B, A, 4]

    gt_ctr = jax.random.uniform(k4, (B, M, 2), minval=8.0, maxval=56.0)
    gt_wh = jax.random.uniform(k5, (B, M, 2), minval=10.0, maxval=30.0)
    gt_bboxes = jnp.concatenate([gt_ctr - gt_wh / 2, gt_ctr + gt_wh / 2], axis=-1)  # [B, M, 4]
    gt_labels = jax.random.randint(k6, (B, M, 1), 0, C)                        # [B, M, 1]

    # batch 0: all 8 gts valid; batch 1: 5 valid, 3 padded.
    pad_gt_mask = jnp.array([[1.0] * 8, [1.0] * 5 + [0.0] * 3],
                            dtype=jnp.float32)[..., None]                      # [B, M, 1]
    num_anchors_list = [A]

    assigner = TaskAlignedAssigner(topk=topk, alpha=1.0, beta=6.0, eps=1e-9,
                                   num_classes=C)
    labels, bboxes, scores = assigner(pred_scores, pred_bboxes, anchor_points,
                                      num_anchors_list, gt_labels, gt_bboxes,
                                      pad_gt_mask, bg_index)
    jax.block_until_ready((labels, bboxes, scores))

    # Sanity check against the pure-JAX reference (same core math).
    ref_labels, ref_bboxes, ref_scores = reference_forward(
        assigner, pred_scores, pred_bboxes, anchor_points,
        gt_labels, gt_bboxes, pad_gt_mask, bg_index)

    assert labels.shape == (B, A) and labels.dtype == jnp.int32
    assert bboxes.shape == (B, A, 2)          # mirrors the reference's reshape([-1, 2])
    assert scores.shape == (B, A, C)
    assert bool(jnp.array_equal(labels, ref_labels))
    assert bool(jnp.allclose(bboxes, ref_bboxes, atol=1e-5))
    assert bool(jnp.allclose(scores, ref_scores, rtol=1e-3, atol=1e-4))

    print("KERNEL_OK")
</pallas_src>

<mosaic_0001>
module attributes {stable_mosaic.version = 11 : i64} {
  func.func @_assigner_kernel(%arg0: i32, %arg1: memref<1x16x128xbf16, #tpu.memory_space<vmem>>, %arg2: memref<1x4x128xf32, #tpu.memory_space<vmem>>, %arg3: memref<2x128xf32, #tpu.memory_space<vmem>>, %arg4: memref<1x8x1xi32, #tpu.memory_space<vmem>>, %arg5: memref<1x8x4xf32, #tpu.memory_space<vmem>>, %arg6: memref<1x8x1xf32, #tpu.memory_space<vmem>>, %arg7: memref<1x1x128xi32, #tpu.memory_space<vmem>>, %arg8: memref<1x1x128xi32, #tpu.memory_space<vmem>>, %arg9: memref<1x1x128xf32, #tpu.memory_space<vmem>>) attributes {dimension_semantics = [#tpu.dimension_semantics<parallel>], iteration_bounds = array<i64: 2>, scalar_prefetch = 0 : i64, scratch_operands = 0 : i64, tpu.core_type = #tpu.core_type<tc>, window_params = [{transform_indices = @transform_0, window_bounds = array<i64: 1, 16, 128>}, {transform_indices = @transform_1, window_bounds = array<i64: 1, 4, 128>}, {pipeline_mode = #tpu.pipeline_mode<synchronous>, transform_indices = @transform_2, window_bounds = array<i64: 2, 128>}, {transform_indices = @transform_3, window_bounds = array<i64: 1, 8, 1>}, {transform_indices = @transform_4, window_bounds = array<i64: 1, 8, 4>}, {transform_indices = @transform_5, window_bounds = array<i64: 1, 8, 1>}, {transform_indices = @transform_6, window_bounds = array<i64: 1, 1, 128>}, {transform_indices = @transform_7, window_bounds = array<i64: 1, 1, 128>}, {transform_indices = @transform_8, window_bounds = array<i64: 1, 1, 128>}]} {
    %c0 = arith.constant 0 : index
    %c0_0 = arith.constant 0 : index
    %c0_1 = arith.constant 0 : index
    %0 = vector.load %arg1[%c0, %c0_0, %c0_1] : memref<1x16x128xbf16, #tpu.memory_space<vmem>>, vector<1x16x128xbf16>
    %1 = vector.shape_cast %0 : vector<1x16x128xbf16> to vector<16x128xbf16>
    %c0_2 = arith.constant 0 : index
    %c0_3 = arith.constant 0 : index
    %c0_4 = arith.constant 0 : index
    %2 = vector.load %arg2[%c0_2, %c0_3, %c0_4] : memref<1x4x128xf32, #tpu.memory_space<vmem>>, vector<1x4x128xf32>
    %3 = vector.shape_cast %2 : vector<1x4x128xf32> to vector<4x128xf32>
    %c0_5 = arith.constant 0 : index
    %c0_6 = arith.constant 0 : index
    %4 = vector.load %arg3[%c0_5, %c0_6] : memref<2x128xf32, #tpu.memory_space<vmem>>, vector<2x128xf32>
    %c0_7 = arith.constant 0 : index
    %c0_8 = arith.constant 0 : index
    %c0_9 = arith.constant 0 : index
    %5 = vector.load %arg4[%c0_7, %c0_8, %c0_9] : memref<1x8x1xi32, #tpu.memory_space<vmem>>, vector<1x8x1xi32>
    %6 = vector.shape_cast %5 : vector<1x8x1xi32> to vector<8x1xi32>
    %c0_10 = arith.constant 0 : index
    %c0_11 = arith.constant 0 : index
    %c0_12 = arith.constant 0 : index
    %7 = vector.load %arg5[%c0_10, %c0_11, %c0_12] : memref<1x8x4xf32, #tpu.memory_space<vmem>>, vector<1x8x4xf32>
    %8 = vector.shape_cast %7 : vector<1x8x4xf32> to vector<8x4xf32>
    %c0_13 = arith.constant 0 : index
    %c0_14 = arith.constant 0 : index
    %c0_15 = arith.constant 0 : index
    %9 = vector.load %arg6[%c0_13, %c0_14, %c0_15] : memref<1x8x1xf32, #tpu.memory_space<vmem>>, vector<1x8x1xf32>
    %10 = vector.shape_cast %9 : vector<1x8x1xf32> to vector<8x1xf32>
    %11 = vector.extract_strided_slice %8 {offsets = [0, 0], sizes = [8, 1], strides = [1, 1]} : vector<8x4xf32> to vector<8x1xf32>
    %12 = vector.extract_strided_slice %8 {offsets = [0, 1], sizes = [8, 1], strides = [1, 1]} : vector<8x4xf32> to vector<8x1xf32>
    %13 = vector.extract_strided_slice %8 {offsets = [0, 2], sizes = [8, 1], strides = [1, 1]} : vector<8x4xf32> to vector<8x1xf32>
    %14 = vector.extract_strided_slice %8 {offsets = [0, 3], sizes = [8, 1], strides = [1, 1]} : vector<8x4xf32> to vector<8x1xf32>
    %15 = vector.shape_cast %11 : vector<8x1xf32> to vector<8x1xf32>
    %16 = vector.broadcast %15 : vector<8x1xf32> to vector<8x128xf32>
    %17 = vector.shape_cast %12 : vector<8x1xf32> to vector<8x1xf32>
    %18 = vector.broadcast %17 : vector<8x1xf32> to vector<8x128xf32>
    %19 = vector.shape_cast %13 : vector<8x1xf32> to vector<8x1xf32>
    %20 = vector.broadcast %19 : vector<8x1xf32> to vector<8x128xf32>
    %21 = vector.shape_cast %14 : vector<8x1xf32> to vector<8x1xf32>
    %22 = vector.broadcast %21 : vector<8x1xf32> to vector<8x128xf32>
    %23 = vector.extract_strided_slice %3 {offsets = [0, 0], sizes = [1, 128], strides = [1, 1]} : vector<4x128xf32> to vector<1x128xf32>
    %24 = vector.extract_strided_slice %3 {offsets = [1, 0], sizes = [1, 128], strides = [1, 1]} : vector<4x128xf32> to vector<1x128xf32>
    %25 = vector.extract_strided_slice %3 {offsets = [2, 0], sizes = [1, 128], strides = [1, 1]} : vector<4x128xf32> to vector<1x128xf32>
    %26 = vector.extract_strided_slice %3 {offsets = [3, 0], sizes = [1, 128], strides = [1, 1]} : vector<4x128xf32> to vector<1x128xf32>
    %27 = vector.broadcast %25 : vector<1x128xf32> to vector<8x128xf32>
    %28 = arith.minimumf %20, %27 : vector<8x128xf32>
    %29 = vector.broadcast %23 : vector<1x128xf32> to vector<8x128xf32>
    %30 = arith.maximumf %16, %29 : vector<8x128xf32>
    %31 = arith.subf %28, %30 : vector<8x128xf32>
    %cst = arith.constant 0.000000e+00 : f32
    %32 = vector.broadcast %cst : f32 to vector<8x128xf32>
    %33 = arith.maximumf %31, %32 : vector<8x128xf32>
    %34 = vector.broadcast %26 : vector<1x128xf32> to vector<8x128xf32>
    %35 = arith.minimumf %22, %34 : vector<8x128xf32>
    %36 = vector.broadcast %24 : vector<1x128xf32> to vector<8x128xf32>
    %37 = arith.maximumf %18, %36 : vector<8x128xf32>
    %38 = arith.subf %35, %37 : vector<8x128xf32>
    %cst_16 = arith.constant 0.000000e+00 : f32
    %39 = vector.broadcast %cst_16 : f32 to vector<8x128xf32>
    %40 = arith.maximumf %38, %39 : vector<8x128xf32>
    %41 = arith.mulf %33, %40 : vector<8x128xf32>
    %42 = arith.subf %13, %11 : vector<8x1xf32>
    %cst_17 = arith.constant 0.000000e+00 : f32
    %43 = vector.broadcast %cst_17 : f32 to vector<8x1xf32>
    %44 = arith.maximumf %42, %43 : vector<8x1xf32>
    %45 = arith.subf %14, %12 : vector<8x1xf32>
    %cst_18 = arith.constant 0.000000e+00 : f32
    %46 = vector.broadcast %cst_18 : f32 to vector<8x1xf32>
    %47 = arith.maximumf %45, %46 : vector<8x1xf32>
    %48 = arith.mulf %44, %47 : vector<8x1xf32>
    %49 = arith.subf %25, %23 : vector<1x128xf32>
    %cst_19 = arith.constant 0.000000e+00 : f32
    %50 = vector.broadcast %cst_19 : f32 to vector<1x128xf32>
    %51 = arith.maximumf %49, %50 : vector<1x128xf32>
    %52 = arith.subf %26, %24 : vector<1x128xf32>
    %cst_20 = arith.constant 0.000000e+00 : f32
    %53 = vector.broadcast %cst_20 : f32 to vector<1x128xf32>
    %54 = arith.maximumf %52, %53 : vector<1x128xf32>
    %55 = arith.mulf %51, %54 : vector<1x128xf32>
    %56 = vector.broadcast %48 : vector<8x1xf32> to vector<8x128xf32>
    %57 = vector.broadcast %55 : vector<1x128xf32> to vector<8x128xf32>
    %58 = arith.addf %56, %57 : vector<8x128xf32>
    %59 = arith.subf %58, %41 : vector<8x128xf32>
    %cst_21 = arith.constant 9.99999971E-10 : f32
    %60 = vector.broadcast %cst_21 : f32 to vector<8x128xf32>
    %61 = arith.addf %59, %60 : vector<8x128xf32>
    %62 = arith.divf %41, %61 : vector<8x128xf32>
    %63 = tpu.iota {dimensions = array<i32: 1>} : vector<8x16xi32>
    %64 = vector.broadcast %6 : vector<8x1xi32> to vector<8x16xi32>
    %65 = arith.cmpi eq, %64, %63 : vector<8x16xi32>
    %cst_22 = arith.constant 1.000000e+00 : f32
    %cst_23 = arith.constant 0.000000e+00 : f32
    %66 = vector.broadcast %cst_22 : f32 to vector<8x16xf32>
    %67 = vector.broadcast %cst_23 : f32 to vector<8x16xf32>
    %68 = arith.select %65, %66, %67 : vector<8x16xi1>, vector<8x16xf32>
    %69 = arith.truncf %68 : vector<8x16xf32> to vector<8x16xbf16>
    %cst_24 = arith.constant dense<0.000000e+00> : vector<8x128xf32>
    %70 = tpu.matmul %69, %1, %cst_24 {dimension_numbers = #tpu.dot_dimension_numbers<[1], [0], [0], [1], [0, 0, 1, 1], [], []>} : vector<8x16xbf16>, vector<16x128xbf16>, vector<8x128xf32> -> vector<8x128xf32>
    %71 = arith.mulf %62, %62 : vector<8x128xf32>
    %72 = arith.mulf %71, %71 : vector<8x128xf32>
    %73 = arith.mulf %71, %72 : vector<8x128xf32>
    %74 = arith.mulf %70, %73 : vector<8x128xf32>
    %75 = vector.extract_strided_slice %4 {offsets = [0, 0], sizes = [1, 128], strides = [1, 1]} : vector<2x128xf32> to vector<1x128xf32>
    %76 = vector.extract_strided_slice %4 {offsets = [1, 0], sizes = [1, 128], strides = [1, 1]} : vector<2x128xf32> to vector<1x128xf32>
    %77 = vector.broadcast %75 : vector<1x128xf32> to vector<8x128xf32>
    %78 = arith.subf %77, %16 : vector<8x128xf32>
    %79 = vector.broadcast %76 : vector<1x128xf32> to vector<8x128xf32>
    %80 = arith.subf %79, %18 : vector<8x128xf32>
    %81 = arith.minimumf %78, %80 : vector<8x128xf32>
    %82 = vector.broadcast %75 : vector<1x128xf32> to vector<8x128xf32>
    %83 = arith.subf %20, %82 : vector<8x128xf32>
    %84 = vector.broadcast %76 : vector<1x128xf32> to vector<8x128xf32>
    %85 = arith.subf %22, %84 : vector<8x128xf32>
    %86 = arith.minimumf %83, %85 : vector<8x128xf32>
    %87 = arith.minimumf %81, %86 : vector<8x128xf32>
    %cst_25 = arith.constant 9.99999971E-10 : f32
    %88 = vector.broadcast %cst_25 : f32 to vector<8x128xf32>
    %89 = arith.cmpf ogt, %87, %88 : vector<8x128xf32>
    %90 = arith.extui %89 : vector<8x128xi1> to vector<8x128xi32>
    %91 = arith.sitofp %90 : vector<8x128xi32> to vector<8x128xf32>
    %92 = tpu.iota {dimensions = array<i32: 1>} : vector<1x128xi32>
    %c64_i32 = arith.constant 64 : i32
    %93 = vector.broadcast %c64_i32 : i32 to vector<1x128xi32>
    %94 = arith.cmpi slt, %92, %93 : vector<1x128xi32>
    %95 = tpu.iota {dimensions = array<i32: 1>} : vector<8x128xi32>
    %96 = arith.mulf %74, %91 : vector<8x128xf32>
    %cst_26 = arith.constant 0xFF800000 : f32
    %97 = vector.shape_cast %94 : vector<1x128xi1> to vector<1x128xi1>
    %98 = vector.broadcast %97 : vector<1x128xi1> to vector<8x128xi1>
    %99 = vector.broadcast %cst_26 : f32 to vector<8x128xf32>
    %100 = arith.select %98, %96, %99 : vector<8x128xi1>, vector<8x128xf32>
    %c127_i32 = arith.constant 127 : i32
    %101 = vector.broadcast %c127_i32 : i32 to vector<8x128xi32>
    %102 = arith.subi %101, %95 : vector<8x128xi32>
    %103 = tpu.bitcast %100 : vector<8x128xf32> -> vector<8x128xi32>
    %c2147483647_i32 = arith.constant 2147483647 : i32
    %104 = vector.broadcast %c2147483647_i32 : i32 to vector<8x128xi32>
    %105 = arith.andi %103, %104 : vector<8x128xi32>
    %c0_i32 = arith.constant 0 : i32
    %106 = vector.broadcast %c0_i32 : i32 to vector<8x128xi32>
    %107 = arith.cmpi sge, %103, %106 : vector<8x128xi32>
    %c0_i32_27 = arith.constant 0 : i32
    %108 = vector.broadcast %c0_i32_27 : i32 to vector<8x128xi32>
    %109 = arith.subi %108, %105 : vector<8x128xi32>
    %110 = arith.select %107, %103, %109 : vector<8x128xi1>, vector<8x128xi32>
    %c-128_i32 = arith.constant -128 : i32
    %111 = vector.broadcast %c-128_i32 : i32 to vector<8x128xi32>
    %112 = arith.andi %110, %111 : vector<8x128xi32>
    %113 = arith.ori %112, %102 : vector<8x128xi32>
    %c-2147483648_i32 = arith.constant -2147483648 : i32
    %114 = vector.broadcast %c-2147483648_i32 : i32 to vector<8x1xi32>
    %c0_i32_28 = arith.constant 0 : i32
    %cst_29 = arith.constant dense<-2147483648> : vector<8xi32>
    %115 = vector.multi_reduction <maxsi>, %113, %cst_29 [1] : vector<8x128xi32> to vector<8xi32>
    %116 = vector.shape_cast %115 : vector<8xi32> to vector<8x1xi32>
    %117 = vector.broadcast %116 : vector<8x1xi32> to vector<8x128xi32>
    %118 = arith.cmpi eq, %113, %117 : vector<8x128xi32>
    %c-2147483648_i32_30 = arith.constant -2147483648 : i32
    %119 = vector.broadcast %c-2147483648_i32_30 : i32 to vector<8x128xi32>
    %120 = arith.select %118, %119, %113 : vector<8x128xi1>, vector<8x128xi32>
    %c1_i32 = arith.constant 1 : i32
    %cst_31 = arith.constant dense<-2147483648> : vector<8xi32>
    %121 = vector.multi_reduction <maxsi>, %120, %cst_31 [1] : vector<8x128xi32> to vector<8xi32>
    %122 = vector.shape_cast %121 : vector<8xi32> to vector<8x1xi32>
    %123 = vector.broadcast %122 : vector<8x1xi32> to vector<8x128xi32>
    %124 = arith.cmpi eq, %120, %123 : vector<8x128xi32>
    %c-2147483648_i32_32 = arith.constant -2147483648 : i32
    %125 = vector.broadcast %c-2147483648_i32_32 : i32 to vector<8x128xi32>
    %126 = arith.select %124, %125, %120 : vector<8x128xi1>, vector<8x128xi32>
    %c2_i32 = arith.constant 2 : i32
    %cst_33 = arith.constant dense<-2147483648> : vector<8xi32>
    %127 = vector.multi_reduction <maxsi>, %126, %cst_33 [1] : vector<8x128xi32> to vector<8xi32>
    %128 = vector.shape_cast %127 : vector<8xi32> to vector<8x1xi32>
    %129 = vector.broadcast %128 : vector<8x1xi32> to vector<8x128xi32>
    %130 = arith.cmpi eq, %126, %129 : vector<8x128xi32>
    %c-2147483648_i32_34 = arith.constant -2147483648 : i32
    %131 = vector.broadcast %c-2147483648_i32_34 : i32 to vector<8x128xi32>
    %132 = arith.select %130, %131, %126 : vector<8x128xi1>, vector<8x128xi32>
    %c3_i32 = arith.constant 3 : i32
    %cst_35 = arith.constant dense<-2147483648> : vector<8xi32>
    %133 = vector.multi_reduction <maxsi>, %132, %cst_35 [1] : vector<8x128xi32> to vector<8xi32>
    %134 = vector.shape_cast %133 : vector<8xi32> to vector<8x1xi32>
    %135 = vector.broadcast %134 : vector<8x1xi32> to vector<8x128xi32>
    %136 = arith.cmpi eq, %132, %135 : vector<8x128xi32>
    %c-2147483648_i32_36 = arith.constant -2147483648 : i32
    %137 = vector.broadcast %c-2147483648_i32_36 : i32 to vector<8x128xi32>
    %138 = arith.select %136, %137, %132 : vector<8x128xi1>, vector<8x128xi32>
    %c4_i32 = arith.constant 4 : i32
    %cst_37 = arith.constant dense<-2147483648> : vector<8xi32>
    %139 = vector.multi_reduction <maxsi>, %138, %cst_37 [1] : vector<8x128xi32> to vector<8xi32>
    %140 = vector.shape_cast %139 : vector<8xi32> to vector<8x1xi32>
    %141 = vector.broadcast %140 : vector<8x1xi32> to vector<8x128xi32>
    %142 = arith.cmpi eq, %138, %141 : vector<8x128xi32>
    %c-2147483648_i32_38 = arith.constant -2147483648 : i32
    %143 = vector.broadcast %c-2147483648_i32_38 : i32 to vector<8x128xi32>
    %144 = arith.select %142, %143, %138 : vector<8x128xi1>, vector<8x128xi32>
    %c5_i32 = arith.constant 5 : i32
    %cst_39 = arith.constant dense<-2147483648> : vector<8xi32>
    %145 = vector.multi_reduction <maxsi>, %144, %cst_39 [1] : vector<8x128xi32> to vector<8xi32>
    %146 = vector.shape_cast %145 : vector<8xi32> to vector<8x1xi32>
    %147 = vector.broadcast %146 : vector<8x1xi32> to vector<8x128xi32>
    %148 = arith.cmpi eq, %144, %147 : vector<8x128xi32>
    %c-2147483648_i32_40 = arith.constant -2147483648 : i32
    %149 = vector.broadcast %c-2147483648_i32_40 : i32 to vector<8x128xi32>
    %150 = arith.select %148, %149, %144 : vector<8x128xi1>, vector<8x128xi32>
    %c6_i32 = arith.constant 6 : i32
    %cst_41 = arith.constant dense<-2147483648> : vector<8xi32>
    %151 = vector.multi_reduction <maxsi>, %150, %cst_41 [1] : vector<8x128xi32> to vector<8xi32>
    %152 = vector.shape_cast %151 : vector<8xi32> to vector<8x1xi32>
    %153 = vector.broadcast %152 : vector<8x1xi32> to vector<8x128xi32>
    %154 = arith.cmpi eq, %150, %153 : vector<8x128xi32>
    %c-2147483648_i32_42 = arith.constant -2147483648 : i32
    %155 = vector.broadcast %c-2147483648_i32_42 : i32 to vector<8x128xi32>
    %156 = arith.select %154, %155, %150 : vector<8x128xi1>, vector<8x128xi32>
    %c7_i32 = arith.constant 7 : i32
    %cst_43 = arith.constant dense<-2147483648> : vector<8xi32>
    %157 = vector.multi_reduction <maxsi>, %156, %cst_43 [1] : vector<8x128xi32> to vector<8xi32>
    %158 = vector.shape_cast %157 : vector<8xi32> to vector<8x1xi32>
    %159 = vector.broadcast %158 : vector<8x1xi32> to vector<8x128xi32>
    %160 = arith.cmpi eq, %156, %159 : vector<8x128xi32>
    %c-2147483648_i32_44 = arith.constant -2147483648 : i32
    %161 = vector.broadcast %c-2147483648_i32_44 : i32 to vector<8x128xi32>
    %162 = arith.select %160, %161, %156 : vector<8x128xi1>, vector<8x128xi32>
    %c8_i32 = arith.constant 8 : i32
    %cst_45 = arith.constant dense<-2147483648> : vector<8xi32>
    %163 = vector.multi_reduction <maxsi>, %162, %cst_45 [1] : vector<8x128xi32> to vector<8xi32>
    %164 = vector.shape_cast %163 : vector<8xi32> to vector<8x1xi32>
    %165 = vector.broadcast %164 : vector<8x1xi32> to vector<8x128xi32>
    %166 = arith.cmpi eq, %162, %165 : vector<8x128xi32>
    %c-2147483648_i32_46 = arith.constant -2147483648 : i32
    %167 = vector.broadcast %c-2147483648_i32_46 : i32 to vector<8x128xi32>
    %168 = arith.select %166, %167, %162 : vector<8x128xi1>, vector<8x128xi32>
    %c9_i32 = arith.constant 9 : i32
    %cst_47 = arith.constant dense<-2147483648> : vector<8xi32>
    %169 = vector.multi_reduction <maxsi>, %168, %cst_47 [1] : vector<8x128xi32> to vector<8xi32>
    %170 = vector.shape_cast %169 : vector<8xi32> to vector<8x1xi32>
    %171 = vector.broadcast %170 : vector<8x1xi32> to vector<8x128xi32>
    %172 = arith.cmpi eq, %168, %171 : vector<8x128xi32>
    %c-2147483648_i32_48 = arith.constant -2147483648 : i32
    %173 = vector.broadcast %c-2147483648_i32_48 : i32 to vector<8x128xi32>
    %174 = arith.select %172, %173, %168 : vector<8x128xi1>, vector<8x128xi32>
    %c10_i32 = arith.constant 10 : i32
    %cst_49 = arith.constant dense<-2147483648> : vector<8xi32>
    %175 = vector.multi_reduction <maxsi>, %174, %cst_49 [1] : vector<8x128xi32> to vector<8xi32>
    %176 = vector.shape_cast %175 : vector<8xi32> to vector<8x1xi32>
    %177 = vector.broadcast %176 : vector<8x1xi32> to vector<8x128xi32>
    %178 = arith.cmpi eq, %174, %177 : vector<8x128xi32>
    %c-2147483648_i32_50 = arith.constant -2147483648 : i32
    %179 = vector.broadcast %c-2147483648_i32_50 : i32 to vector<8x128xi32>
    %180 = arith.select %178, %179, %174 : vector<8x128xi1>, vector<8x128xi32>
    %c11_i32 = arith.constant 11 : i32
    %cst_51 = arith.constant dense<-2147483648> : vector<8xi32>
    %181 = vector.multi_reduction <maxsi>, %180, %cst_51 [1] : vector<8x128xi32> to vector<8xi32>
    %182 = vector.shape_cast %181 : vector<8xi32> to vector<8x1xi32>
    %183 = vector.broadcast %182 : vector<8x1xi32> to vector<8x128xi32>
    %184 = arith.cmpi eq, %180, %183 : vector<8x128xi32>
    %c-2147483648_i32_52 = arith.constant -2147483648 : i32
    %185 = vector.broadcast %c-2147483648_i32_52 : i32 to vector<8x128xi32>
    %186 = arith.select %184, %185, %180 : vector<8x128xi1>, vector<8x128xi32>
    %c12_i32 = arith.constant 12 : i32
    %cst_53 = arith.constant dense<-2147483648> : vector<8xi32>
    %187 = vector.multi_reduction <maxsi>, %186, %cst_53 [1] : vector<8x128xi32> to vector<8xi32>
    %188 = vector.shape_cast %187 : vector<8xi32> to vector<8x1xi32>
    %189 = vector.broadcast %188 : vector<8x1xi32> to vector<8x128xi32>
    %190 = arith.cmpi eq, %186, %189 : vector<8x128xi32>
    %c-2147483648_i32_54 = arith.constant -2147483648 : i32
    %191 = vector.broadcast %c-2147483648_i32_54 : i32 to vector<8x128xi32>
    %192 = arith.select %190, %191, %186 : vector<8x128xi1>, vector<8x128xi32>
    %193 = vector.broadcast %188 : vector<8x1xi32> to vector<8x128xi32>
    %194 = arith.cmpi sge, %113, %193 : vector<8x128xi32>
    %195 = arith.extui %194 : vector<8x128xi1> to vector<8x128xi32>
    %196 = arith.sitofp %195 : vector<8x128xi32> to vector<8x128xf32>
    %197 = vector.shape_cast %10 : vector<8x1xf32> to vector<8x1xf32>
    %198 = vector.broadcast %197 : vector<8x1xf32> to vector<8x128xf32>
    %199 = arith.mulf %196, %91 : vector<8x128xf32>
    %200 = arith.mulf %199, %198 : vector<8x128xf32>
    %cst_55 = arith.constant 0.000000e+00 : f32
    %201 = vector.shape_cast %94 : vector<1x128xi1> to vector<1x128xi1>
    %202 = vector.broadcast %201 : vector<1x128xi1> to vector<8x128xi1>
    %203 = vector.broadcast %cst_55 : f32 to vector<8x128xf32>
    %204 = arith.select %202, %200, %203 : vector<8x128xi1>, vector<8x128xf32>
    %cst_56 = arith.constant dense<0.000000e+00> : vector<128xf32>
    %205 = vector.multi_reduction <add>, %204, %cst_56 [0] : vector<8x128xf32> to vector<128xf32>
    %206 = vector.shape_cast %205 : vector<128xf32> to vector<1x128xf32>
    %207 = tpu.iota {dimensions = array<i32: 0>} : vector<8x128xi32>
    %c7_i32_57 = arith.constant 7 : i32
    %208 = vector.broadcast %c7_i32_57 : i32 to vector<8x128xi32>
    %209 = arith.subi %208, %207 : vector<8x128xi32>
    %210 = tpu.bitcast %62 : vector<8x128xf32> -> vector<8x128xi32>
    %c2147483647_i32_58 = arith.constant 2147483647 : i32
    %211 = vector.broadcast %c2147483647_i32_58 : i32 to vector<8x128xi32>
    %212 = arith.andi %210, %211 : vector<8x128xi32>
    %c0_i32_59 = arith.constant 0 : i32
    %213 = vector.broadcast %c0_i32_59 : i32 to vector<8x128xi32>
    %214 = arith.cmpi sge, %210, %213 : vector<8x128xi32>
    %c0_i32_60 = arith.constant 0 : i32
    %215 = vector.broadcast %c0_i32_60 : i32 to vector<8x128xi32>
    %216 = arith.subi %215, %212 : vector<8x128xi32>
    %217 = arith.select %214, %210, %216 : vector<8x128xi1>, vector<8x128xi32>
    %c-8_i32 = arith.constant -8 : i32
    %218 = vector.broadcast %c-8_i32 : i32 to vector<8x128xi32>
    %219 = arith.andi %217, %218 : vector<8x128xi32>
    %220 = arith.ori %219, %209 : vector<8x128xi32>
    %cst_61 = arith.constant dense<-2147483648> : vector<128xi32>
    %221 = vector.multi_reduction <maxsi>, %220, %cst_61 [0] : vector<8x128xi32> to vector<128xi32>
    %222 = vector.shape_cast %221 : vector<128xi32> to vector<1x128xi32>
    %223 = vector.broadcast %222 : vector<1x128xi32> to vector<8x128xi32>
    %224 = arith.cmpi eq, %220, %223 : vector<8x128xi32>
    %225 = arith.extui %224 : vector<8x128xi1> to vector<8x128xi32>
    %226 = arith.sitofp %225 : vector<8x128xi32> to vector<8x128xf32>
    %cst_62 = arith.constant 1.000000e+00 : f32
    %227 = vector.broadcast %cst_62 : f32 to vector<1x128xf32>
    %228 = arith.cmpf ogt, %206, %227 : vector<1x128xf32>
    %229 = vector.shape_cast %228 : vector<1x128xi1> to vector<1x128xi1>
    %230 = vector.broadcast %229 : vector<1x128xi1> to vector<8x128xi1>
    %231 = arith.select %230, %226, %204 : vector<8x128xi1>, vector<8x128xf32>
    %cst_63 = arith.constant 1.000000e+00 : f32
    %232 = vector.broadcast %cst_63 : f32 to vector<1x128xf32>
    %233 = arith.select %228, %232, %206 : vector<1x128xi1>, vector<1x128xf32>
    %234 = vector.shape_cast %6 : vector<8x1xi32> to vector<8x1xi32>
    %235 = vector.broadcast %234 : vector<8x1xi32> to vector<8x128xi32>
    %cst_64 = arith.constant 5.000000e-01 : f32
    %236 = vector.broadcast %cst_64 : f32 to vector<8x128xf32>
    %237 = arith.cmpf ogt, %231, %236 : vector<8x128xf32>
    %c16_i32 = arith.constant 16 : i32
    %238 = vector.broadcast %c16_i32 : i32 to vector<8x128xi32>
    %239 = arith.muli %207, %238 : vector<8x128xi32>
    %240 = arith.addi %239, %235 : vector<8x128xi32>
    %c128_i32 = arith.constant 128 : i32
    %241 = vector.broadcast %c128_i32 : i32 to vector<8x128xi32>
    %242 = arith.select %237, %240, %241 : vector<8x128xi1>, vector<8x128xi32>
    %cst_65 = arith.constant dense<2147483647> : vector<128xi32>
    %243 = vector.multi_reduction <minsi>, %242, %cst_65 [0] : vector<8x128xi32> to vector<128xi32>
    %244 = vector.shape_cast %243 : vector<128xi32> to vector<1x128xi32>
    %cst_66 = arith.constant 0.000000e+00 : f32
    %245 = vector.broadcast %cst_66 : f32 to vector<1x128xf32>
    %246 = arith.cmpf ogt, %233, %245 : vector<1x128xf32>
    %c4_i32_67 = arith.constant 4 : i32
    %247 = vector.broadcast %c4_i32_67 : i32 to vector<1x128xi32>
    %248 = arith.shrsi %244, %247 : vector<1x128xi32>
    %c0_i32_68 = arith.constant 0 : i32
    %249 = vector.broadcast %c0_i32_68 : i32 to vector<1x128xi32>
    %250 = arith.select %246, %248, %249 : vector<1x128xi1>, vector<1x128xi32>
    %c15_i32 = arith.constant 15 : i32
    %251 = vector.broadcast %c15_i32 : i32 to vector<1x128xi32>
    %252 = arith.andi %244, %251 : vector<1x128xi32>
    %c16_i32_69 = arith.constant 16 : i32
    %253 = vector.broadcast %c16_i32_69 : i32 to vector<1x128xi32>
    %254 = arith.select %246, %252, %253 : vector<1x128xi1>, vector<1x128xi32>
    %255 = arith.mulf %74, %231 : vector<8x128xf32>
    %cst_70 = arith.constant dense<0xFF800000> : vector<8xf32>
    %256 = vector.multi_reduction <maximumf>, %255, %cst_70 [1] : vector<8x128xf32> to vector<8xf32>
    %257 = vector.shape_cast %256 : vector<8xf32> to vector<8x1xf32>
    %258 = arith.mulf %62, %231 : vector<8x128xf32>
    %cst_71 = arith.constant dense<0xFF800000> : vector<8xf32>
    %259 = vector.multi_reduction <maximumf>, %258, %cst_71 [1] : vector<8x128xf32> to vector<8xf32>
    %260 = vector.shape_cast %259 : vector<8xf32> to vector<8x1xf32>
    %cst_72 = arith.constant 9.99999971E-10 : f32
    %261 = vector.broadcast %cst_72 : f32 to vector<8x1xf32>
    %262 = arith.addf %257, %261 : vector<8x1xf32>
    %263 = arith.divf %260, %262 : vector<8x1xf32>
    %264 = vector.broadcast %263 : vector<8x1xf32> to vector<8x128xf32>
    %265 = arith.mulf %255, %264 : vector<8x128xf32>
    %cst_73 = arith.constant dense<0xFF800000> : vector<128xf32>
    %266 = vector.multi_reduction <maximumf>, %265, %cst_73 [0] : vector<8x128xf32> to vector<128xf32>
    %267 = vector.shape_cast %266 : vector<128xf32> to vector<1x128xf32>
    %c0_74 = arith.constant 0 : index
    %c0_75 = arith.constant 0 : index
    %c0_76 = arith.constant 0 : index
    %268 = vector.load %arg7[%c0_74, %c0_75, %c0_76] : memref<1x1x128xi32, #tpu.memory_space<vmem>>, vector<1x1x128xi32>
    %269 = vector.shape_cast %268 : vector<1x1x128xi32> to vector<1x128xi32>
    %270 = vector.shape_cast %250 : vector<1x128xi32> to vector<1x1x128xi32>
    tpu.vector_store %arg7[%c0_74, %c0_75, %c0_76], %270 {strides = array<i32>} : memref<1x1x128xi32, #tpu.memory_space<vmem>>, vector<1x1x128xi32>,
    %c0_77 = arith.constant 0 : index
    %c0_78 = arith.constant 0 : index
    %c0_79 = arith.constant 0 : index
    %271 = vector.load %arg8[%c0_77, %c0_78, %c0_79] : memref<1x1x128xi32, #tpu.memory_space<vmem>>, vector<1x1x128xi32>
    %272 = vector.shape_cast %271 : vector<1x1x128xi32> to vector<1x128xi32>
    %273 = vector.shape_cast %254 : vector<1x128xi32> to vector<1x1x128xi32>
    tpu.vector_store %arg8[%c0_77, %c0_78, %c0_79], %273 {strides = array<i32>} : memref<1x1x128xi32, #tpu.memory_space<vmem>>, vector<1x1x128xi32>,
    %c0_80 = arith.constant 0 : index
    %c0_81 = arith.constant 0 : index
    %c0_82 = arith.constant 0 : index
    %274 = vector.load %arg9[%c0_80, %c0_81, %c0_82] : memref<1x1x128xf32, #tpu.memory_space<vmem>>, vector<1x1x128xf32>
    %275 = vector.shape_cast %274 : vector<1x1x128xf32> to vector<1x128xf32>
    %276 = vector.shape_cast %267 : vector<1x128xf32> to vector<1x1x128xf32>
    tpu.vector_store %arg9[%c0_80, %c0_81, %c0_82], %276 {strides = array<i32>} : memref<1x1x128xf32, #tpu.memory_space<vmem>>, vector<1x1x128xf32>,
    return
  }
  func.func @transform_0(%arg0: i32) -> (i32, i32, i32) {
    %c0_i32 = arith.constant 0 : i32
    %c0_i32_0 = arith.constant 0 : i32
    %c0_i32_1 = arith.constant 0 : i32
    return %arg0, %c0_i32, %c0_i32_0 : i32, i32, i32
  }
  func.func @transform_1(%arg0: i32) -> (i32, i32, i32) {
    %c0_i32 = arith.constant 0 : i32
    %c0_i32_0 = arith.constant 0 : i32
    %c0_i32_1 = arith.constant 0 : i32
    return %arg0, %c0_i32, %c0_i32_0 : i32, i32, i32
  }
  func.func @transform_2(%arg0: i32) -> (i32, i32) {
    %c0_i32 = arith.constant 0 : i32
    %c0_i32_0 = arith.constant 0 : i32
    %c0_i32_1 = arith.constant 0 : i32
    return %c0_i32, %c0_i32_0 : i32, i32
  }
  func.func @transform_3(%arg0: i32) -> (i32, i32, i32) {
    %c0_i32 = arith.constant 0 : i32
    %c0_i32_0 = arith.constant 0 : i32
    %c0_i32_1 = arith.constant 0 : i32
    return %arg0, %c0_i32, %c0_i32_0 : i32, i32, i32
  }
  func.func @transform_4(%arg0: i32) -> (i32, i32, i32) {
    %c0_i32 = arith.constant 0 : i32
    %c0_i32_0 = arith.constant 0 : i32
    %c0_i32_1 = arith.constant 0 : i32
    return %arg0, %c0_i32, %c0_i32_0 : i32, i32, i32
  }
  func.func @transform_5(%arg0: i32) -> (i32, i32, i32) {
    %c0_i32 = arith.constant 0 : i32
    %c0_i32_0 = arith.constant 0 : i32
    %c0_i32_1 = arith.constant 0 : i32
    return %arg0, %c0_i32, %c0_i32_0 : i32, i32, i32
  }
  func.func @transform_6(%arg0: i32) -> (i32, i32, i32) {
    %c0_i32 = arith.constant 0 : i32
    %c0_i32_0 = arith.constant 0 : i32
    %c0_i32_1 = arith.constant 0 : i32
    return %arg0, %c0_i32, %c0_i32_0 : i32, i32, i32
  }
  func.func @transform_7(%arg0: i32) -> (i32, i32, i32) {
    %c0_i32 = arith.constant 0 : i32
    %c0_i32_0 = arith.constant 0 : i32
    %c0_i32_1 = arith.constant 0 : i32
    return %arg0, %c0_i32, %c0_i32_0 : i32, i32, i32
  }
  func.func @transform_8(%arg0: i32) -> (i32, i32, i32) {
    %c0_i32 = arith.constant 0 : i32
    %c0_i32_0 = arith.constant 0 : i32
    %c0_i32_1 = arith.constant 0 : i32
    return %arg0, %c0_i32, %c0_i32_0 : i32, i32, i32
  }
}

</mosaic_0001>

<llo_original>
// kernel: tpu_custom_call.1
$region0: #{tpu_custom_call.1}
  #allocation0 [shape = 'u32[]', space=smem, size = 0x4, offset = 0x4, fixed_abs, tag = 'smem constant byte address 0x4 - core index']
  #allocation1 [shape = 'u32[72,128]{1,0:T(1,128)}', space=vmem, size = 0x9000, scoped, tag = 'internal scratch']
  %s0 = inlined_call_operand.vmem [shape: bf16[2,16,128], index: 0, kind: input, shape index: {}]
  %s1 = inlined_call_operand.vmem [shape: f32[2,4,128], index: 1, kind: input, shape index: {}]
  %s2 = inlined_call_operand.vmem [shape: f32[2,128], index: 2, kind: input, shape index: {}]
  %s3 = inlined_call_operand.vmem [shape: s32[2,8,1], index: 3, kind: input, shape index: {}]
  %s4 = inlined_call_operand.vmem [shape: f32[2,8,4], index: 4, kind: input, shape index: {}]
  %s5 = inlined_call_operand.vmem [shape: f32[2,8,1], index: 5, kind: input, shape index: {}]
  %s6 = inlined_call_operand.hbm [shape: s32[2,1,128], index: 6, kind: output, shape index: {0}]
  %s7 = inlined_call_operand.hbm [shape: s32[2,1,128], index: 7, kind: output, shape index: {1}]
  %s8 = inlined_call_operand.hbm [shape: f32[2,1,128], index: 8, kind: output, shape index: {2}]
  %9 = xla_tuple %s6, %s7, %s8
  %s10 = sld [smem:[#allocation0]]
  $region73: #{tpu_custom_call.1} parent=0
    _
  %s12 = ssub.s32 1, %s10
  %s13 = scalar_select 0, %s12, %s10
  $region1: #{tpu_custom_call.1} parent=0
    #allocation2 [shape = 'u8[1024]{0}', space=vmem, size = 0x400, scoped, tag = 'output window, operand 0']
    #allocation3 [shape = 's32[2]{0}', space=sflag, size = 0x8, scoped, tag = 'scoped memory for tpu_custom_call.1']
    #allocation4 [shape = 'u8[1024]{0}', space=vmem, size = 0x400, scoped, tag = 'output window, operand 1']
    #allocation5 [shape = 's32[2]{0}', space=sflag, size = 0x8, scoped, tag = 'scoped memory for tpu_custom_call.1']
    #allocation6 [shape = 'u8[1024]{0}', space=vmem, size = 0x400, scoped, tag = 'output window, operand 2']
    %14 = vsyncpa [#allocation3], 0
    %s15 = scalar_lea.sflag [#allocation3], 1
    %16 = vsyncpa %s15, 0
    %17 = vsyncpa [#allocation5], 0
    %s18 = scalar_lea.sflag [#allocation5], 1
    %19 = vsyncpa %s18, 0
    loop: start=0, step=1, limit=4
    $region2: #{tpu_custom_call.1} parent=1 // loop_pre_header
      _
    $region3: #{tpu_custom_call.1} parent=1 // loop_header
      %s21 = sphi 0, %s25
      %p22 = scmp.ge.s32.totalorder %s21, 4
      %s31 = sphi 0, %s33
      %s34 = sphi 0, %s31
      %s35 = sphi 0, %s34
      %s51 = sphi 0, %s35
      %s57 = sphi 0, %s59
      %s60 = sphi 0, %s57
      %s61 = sphi 0, %s60
      %s77 = sphi 0, %s61
      %s81 = sphi 0, %s81
      %s83 = sphi 0, %s81
      %s84 = sphi 0, %s83
      %s98 = sphi 0, %s84
      %s104 = sphi 0, %s106
      %s107 = sphi 0, %s104
      %s108 = sphi 0, %s107
      %s124 = sphi 0, %s108
      %s130 = sphi 0, %s132
      %s133 = sphi 0, %s130
      %s134 = sphi 0, %s133
      %s150 = sphi 0, %s134
      %s156 = sphi 0, %s158
      %s159 = sphi 0, %s156
      %s160 = sphi 0, %s159
      %s176 = sphi 0, %s160
      %s182 = sphi 0, %s184
      %s185 = sphi 0, %s182
      %s186 = sphi 0, %s185
      %s202 = sphi 0, %s186
      %s208 = sphi 0, %s210
      %s211 = sphi 0, %s208
      %s212 = sphi 0, %s211
      %s228 = sphi 0, %s212
      %s234 = sphi 0, %s236
      %s237 = sphi 0, %s234
      %s238 = sphi 0, %s237
      %s254 = sphi 0, %s238
    $region4: #{tpu_custom_call.1} parent=1 // loop_header_branch
      %24 = sbr.rel (%p22) target = $region8
    $region5: #{tpu_custom_call.1} parent=1 // loop_body
      %s26 = ssub.s32 %s21, 1
      %s27 = ssub.s32 %s21, 2
      %s28 = sadd.s32 %s21, 1
      %s29 = ssub.s32 %s21, %s28
      %p30 = scmp.eq.s32.totalorder %s29, 0
      %s32 = sadd.s32 %s31, 1
      %s33 = scalar_select %p30, %s31, %s32
      %p36 = pneg %p30
      %p37 = scmp.eq.s32.totalorder %s21, 1
      %p38 = por %p36, %p37
      %p39 = scmp.ne.s32.totalorder %s31, %s34
      %p40 = scmp.eq.s32.totalorder %s21, 0
      %p41 = por %p39, %p40
      %p42 = scmp.ne.s32.totalorder %s31, %s34
      %p43 = scmp.eq.s32.totalorder %s26, 1
      %p44 = por %p42, %p43
      %p45 = scmp.ne.s32.totalorder %s34, %s35
      %p46 = scmp.eq.s32.totalorder %s26, 0
      %p47 = por %p45, %p46
      %p48 = scmp.ne.s32.totalorder %s34, %s35
      %p49 = scmp.eq.s32.totalorder %s27, 1
      %p50 = por %p48, %p49
      %p52 = scmp.ne.s32.totalorder %s35, %s51
      %p53 = scmp.eq.s32.totalorder %s27, 0
      %p54 = por %p52, %p53
      %s55 = ssub.s32 %s21, %s28
      %p56 = scmp.eq.s32.totalorder %s55, 0
      %s58 = sadd.s32 %s57, 1
      %s59 = scalar_select %p56, %s57, %s58
      %p62 = pneg %p56
      %p63 = scmp.eq.s32.totalorder %s21, 1
      %p64 = por %p62, %p63
      %p65 = scmp.ne.s32.totalorder %s57, %s60
      %p66 = scmp.eq.s32.totalorder %s21, 0
      %p67 = por %p65, %p66
      %p68 = scmp.ne.s32.totalorder %s57, %s60
      %p69 = scmp.eq.s32.totalorder %s26, 1
      %p70 = por %p68, %p69
      %p71 = scmp.ne.s32.totalorder %s60, %s61
      %p72 = scmp.eq.s32.totalorder %s26, 0
      %p73 = por %p71, %p72
      %p74 = scmp.ne.s32.totalorder %s60, %s61
      %p75 = scmp.eq.s32.totalorder %s27, 1
      %p76 = por %p74, %p75
      %p78 = scmp.ne.s32.totalorder %s61, %s77
      %p79 = scmp.eq.s32.totalorder %s27, 0
      %p80 = por %p78, %p79
      %s82 = sadd.s32 %s81, 1
      %p85 = scmp.eq.s32.totalorder %s21, 1
      %p86 = scmp.ne.s32.totalorder %s81, %s83
      %p87 = scmp.eq.s32.totalorder %s21, 0
      %p88 = por %p86, %p87
      %p89 = scmp.ne.s32.totalorder %s81, %s83
      %p90 = scmp.eq.s32.totalorder %s26, 1
      %p91 = por %p89, %p90
      %p92 = scmp.ne.s32.totalorder %s83, %s84
      %p93 = scmp.eq.s32.totalorder %s26, 0
      %p94 = por %p92, %p93
      %p95 = scmp.ne.s32.totalorder %s83, %s84
      %p96 = scmp.eq.s32.totalorder %s27, 1
      %p97 = por %p95, %p96
      %p99 = scmp.ne.s32.totalorder %s84, %s98
      %p100 = scmp.eq.s32.totalorder %s27, 0
      %p101 = por %p99, %p100
      %s102 = ssub.s32 %s21, %s28
      %p103 = scmp.eq.s32.totalorder %s102, 0
      %s105 = sadd.s32 %s104, 1
      %s106 = scalar_select %p103, %s104, %s105
      %p109 = pneg %p103
      %p110 = scmp.eq.s32.totalorder %s21, 1
      %p111 = por %p109, %p110
      %p112 = scmp.ne.s32.totalorder %s104, %s107
      %p113 = scmp.eq.s32.totalorder %s21, 0
      %p114 = por %p112, %p113
      %p115 = scmp.ne.s32.totalorder %s104, %s107
      %p116 = scmp.eq.s32.totalorder %s26, 1
      %p117 = por %p115, %p116
      %p118 = scmp.ne.s32.totalorder %s107, %s108
      %p119 = scmp.eq.s32.totalorder %s26, 0
      %p120 = por %p118, %p119
      %p121 = scmp.ne.s32.totalorder %s107, %s108
      %p122 = scmp.eq.s32.totalorder %s27, 1
      %p123 = por %p121, %p122
      %p125 = scmp.ne.s32.totalorder %s108, %s124
      %p126 = scmp.eq.s32.totalorder %s27, 0
      %p127 = por %p125, %p126
      %s128 = ssub.s32 %s21, %s28
      %p129 = scmp.eq.s32.totalorder %s128, 0
      %s131 = sadd.s32 %s130, 1
      %s132 = scalar_select %p129, %s130, %s131
      %p135 = pneg %p129
      %p136 = scmp.eq.s32.totalorder %s21, 1
      %p137 = por %p135, %p136
      %p138 = scmp.ne.s32.totalorder %s130, %s133
      %p139 = scmp.eq.s32.totalorder %s21, 0
      %p140 = por %p138, %p139
      %p141 = scmp.ne.s32.totalorder %s130, %s133
      %p142 = scmp.eq.s32.totalorder %s26, 1
      %p143 = por %p141, %p142
      %p144 = scmp.ne.s32.totalorder %s133, %s134
      %p145 = scmp.eq.s32.totalorder %s26, 0
      %p146 = por %p144, %p145
      %p147 = scmp.ne.s32.totalorder %s133, %s134
      %p148 = scmp.eq.s32.totalorder %s27, 1
      %p149 = por %p147, %p148
      %p151 = scmp.ne.s32.totalorder %s134, %s150
      %p152 = scmp.eq.s32.totalorder %s27, 0
      %p153 = por %p151, %p152
      %s154 = ssub.s32 %s21, %s28
      %p155 = scmp.eq.s32.totalorder %s154, 0
      %s157 = sadd.s32 %s156, 1
      %s158 = scalar_select %p155, %s156, %s157
      %p161 = pneg %p155
      %p162 = scmp.eq.s32.totalorder %s21, 1
      %p163 = por %p161, %p162
      %p164 = scmp.ne.s32.totalorder %s156, %s159
      %p165 = scmp.eq.s32.totalorder %s21, 0
      %p166 = por %p164, %p165
      %p167 = scmp.ne.s32.totalorder %s156, %s159
      %p168 = scmp.eq.s32.totalorder %s26, 1
      %p169 = por %p167, %p168
      %p170 = scmp.ne.s32.totalorder %s159, %s160
      %p171 = scmp.eq.s32.totalorder %s26, 0
      %p172 = por %p170, %p171
      %p173 = scmp.ne.s32.totalorder %s159, %s160
      %p174 = scmp.eq.s32.totalorder %s27, 1
      %p175 = por %p173, %p174
      %p177 = scmp.ne.s32.totalorder %s160, %s176
      %p178 = scmp.eq.s32.totalorder %s27, 0
      %p179 = por %p177, %p178
      %s180 = ssub.s32 %s21, %s28
      %p181 = scmp.eq.s32.totalorder %s180, 0
      %s183 = sadd.s32 %s182, 1
      %s184 = scalar_select %p181, %s182, %s183
      %p187 = pneg %p181
      %p188 = scmp.eq.s32.totalorder %s21, 1
      %p189 = por %p187, %p188
      %p190 = scmp.ne.s32.totalorder %s182, %s185
      %p191 = scmp.eq.s32.totalorder %s21, 0
      %p192 = por %p190, %p191
      %p193 = scmp.ne.s32.totalorder %s182, %s185
      %p194 = scmp.eq.s32.totalorder %s26, 1
      %p195 = por %p193, %p194
      %p196 = scmp.ne.s32.totalorder %s185, %s186
      %p197 = scmp.eq.s32.totalorder %s26, 0
      %p198 = por %p196, %p197
      %p199 = scmp.ne.s32.totalorder %s185, %s186
      %p200 = scmp.eq.s32.totalorder %s27, 1
      %p201 = por %p199, %p200
      %p203 = scmp.ne.s32.totalorder %s186, %s202
      %p204 = scmp.eq.s32.totalorder %s27, 0
      %p205 = por %p203, %p204
      %s206 = ssub.s32 %s21, %s28
      %p207 = scmp.eq.s32.totalorder %s206, 0
      %s209 = sadd.s32 %s208, 1
      %s210 = scalar_select %p207, %s208, %s209
      %p213 = pneg %p207
      %p214 = scmp.eq.s32.totalorder %s21, 1
      %p215 = por %p213, %p214
      %p216 = scmp.ne.s32.totalorder %s208, %s211
      %p217 = scmp.eq.s32.totalorder %s21, 0
      %p218 = por %p216, %p217
      %p219 = scmp.ne.s32.totalorder %s208, %s211
      %p220 = scmp.eq.s32.totalorder %s26, 1
      %p221 = por %p219, %p220
      %p222 = scmp.ne.s32.totalorder %s211, %s212
      %p223 = scmp.eq.s32.totalorder %s26, 0
      %p224 = por %p222, %p223
      %p225 = scmp.ne.s32.totalorder %s211, %s212
      %p226 = scmp.eq.s32.totalorder %s27, 1
      %p227 = por %p225, %p226
      %p229 = scmp.ne.s32.totalorder %s212, %s228
      %p230 = scmp.eq.s32.totalorder %s27, 0
      %p231 = por %p229, %p230
      %s232 = ssub.s32 %s21, %s28
      %p233 = scmp.eq.s32.totalorder %s232, 0
      %s235 = sadd.s32 %s234, 1
      %s236 = scalar_select %p233, %s234, %s235
      %p239 = pneg %p233
      %p240 = scmp.eq.s32.totalorder %s21, 1
      %p241 = por %p239, %p240
      %p242 = scmp.ne.s32.totalorder %s234, %s237
      %p243 = scmp.eq.s32.totalorder %s21, 0
      %p244 = por %p242, %p243
      %p245 = scmp.ne.s32.totalorder %s234, %s237
      %p246 = scmp.eq.s32.totalorder %s26, 1
      %p247 = por %p245, %p246
      %p248 = scmp.ne.s32.totalorder %s237, %s238
      %p249 = scmp.eq.s32.totalorder %s26, 0
      %p250 = por %p248, %p249
      %p251 = scmp.ne.s32.totalorder %s237, %s238
      %p252 = scmp.eq.s32.totalorder %s27, 1
      %p253 = por %p251, %p252
      %p255 = scmp.ne.s32.totalorder %s238, %s254
      %p256 = scmp.eq.s32.totalorder %s27, 0
      %p257 = por %p255, %p256
      %p258 = scmp.le.s32.totalorder 1, %s21
      %p259 = scmp.lt.s32.totalorder %s21, 3
      %p260 = pnand %p258, %p259
      %p261 = pneg %p260
      // Predicated region
      $region9: #{tpu_custom_call.1} parent=5 // pred_check
        _
      $region10: #{tpu_custom_call.1} parent=5 // pred_check_branch
        %263 = sbr.rel (%p260) target = $region12
      $region11: #{tpu_custom_call.1} parent=5 // pred_region
        %s264 = ssub.s32 %s21, 1
        // Predicated region
        $region13: #{tpu_custom_call.1} parent=11 // pred_check
          %p265 = pneg %p94
        $region14: #{tpu_custom_call.1} parent=11 // pred_check_branch
          %267 = sbr.rel (%p265) target = $region16
        $region15: #{tpu_custom_call.1} parent=11 // pred_region
          _
        $region16: #{tpu_custom_call.1} parent=11 // pred_fallthru
          _
      $region12: #{tpu_custom_call.1} parent=5 // pred_fallthru
        _
      %p268 = scmp.lt.s32.totalorder %s21, 2
      // Predicated region
      $region17: #{tpu_custom_call.1} parent=5 // pred_check
        %p269 = pneg %p268
      $region18: #{tpu_custom_call.1} parent=5 // pred_check_branch
        %271 = sbr.rel (%p269) target = $region20
      $region19: #{tpu_custom_call.1} parent=5 // pred_region
        // Predicated region
        $region21: #{tpu_custom_call.1} parent=19 // pred_check
          %p272 = pneg %p41
        $region22: #{tpu_custom_call.1} parent=19 // pred_check_branch
          %274 = sbr.rel (%p272) target = $region24
        $region23: #{tpu_custom_call.1} parent=19 // pred_region
          %p275 = scmp.lt.s32.totalorder %s21, 1
          %s276 = scalar_select %p275, %s21, 1
          %s277 = smul.addr %s276, 2
          %s278 = smul.addr %s277, 4
          %s279 = scalar_lea.vmem %s0, %s278
        $region24: #{tpu_custom_call.1} parent=19 // pred_fallthru
          _
        // Predicated region
        $region25: #{tpu_custom_call.1} parent=19 // pred_check
          %p280 = pneg %p67
        $region26: #{tpu_custom_call.1} parent=19 // pred_check_branch
          %282 = sbr.rel (%p280) target = $region28
        $region27: #{tpu_custom_call.1} parent=19 // pred_region
          %p283 = scmp.lt.s32.totalorder %s21, 1
          %s284 = scalar_select %p283, %s21, 1
          %s285 = smul.addr %s284, 4
          %s286 = scalar_lea.vmem %s1, %s285
        $region28: #{tpu_custom_call.1} parent=19 // pred_fallthru
          _
        // Predicated region
        $region29: #{tpu_custom_call.1} parent=19 // pred_check
          %p287 = pneg %p114
        $region30: #{tpu_custom_call.1} parent=19 // pred_check_branch
          %289 = sbr.rel (%p287) target = $region32
        $region31: #{tpu_custom_call.1} parent=19 // pred_region
          %p290 = scmp.lt.s32.totalorder %s21, 1
          %s291 = scalar_select %p290, %s21, 1
          %s292 = smul.addr %s291, 8
          %s293 = scalar_lea.vmem %s3, %s292
        $region32: #{tpu_custom_call.1} parent=19 // pred_fallthru
          _
        // Predicated region
        $region33: #{tpu_custom_call.1} parent=19 // pred_check
          %p294 = pneg %p140
        $region34: #{tpu_custom_call.1} parent=19 // pred_check_branch
          %296 = sbr.rel (%p294) target = $region36
        $region35: #{tpu_custom_call.1} parent=19 // pred_region
          %p297 = scmp.lt.s32.totalorder %s21, 1
          %s298 = scalar_select %p297, %s21, 1
          %s299 = smul.addr %s298, 8
          %s300 = scalar_lea.vmem %s4, %s299
        $region36: #{tpu_custom_call.1} parent=19 // pred_fallthru
          _
        // Predicated region
        $region37: #{tpu_custom_call.1} parent=19 // pred_check
          %p301 = pneg %p166
        $region38: #{tpu_custom_call.1} parent=19 // pred_check_branch
          %303 = sbr.rel (%p301) target = $region40
        $region39: #{tpu_custom_call.1} parent=19 // pred_region
          %p304 = scmp.lt.s32.totalorder %s21, 1
          %s305 = scalar_select %p304, %s21, 1
          %s306 = smul.addr %s305, 8
          %s307 = scalar_lea.vmem %s5, %s306
        $region40: #{tpu_custom_call.1} parent=19 // pred_fallthru
          _
      $region20: #{tpu_custom_call.1} parent=5 // pred_fallthru
        _
      %p308 = scmp.le.s32.totalorder 1, %s21
      %p309 = scmp.lt.s32.totalorder %s21, 3
      %p310 = pnand %p308, %p309
      %p311 = pneg %p310
      // Predicated region
      $region41: #{tpu_custom_call.1} parent=5 // pred_check
        _
      $region42: #{tpu_custom_call.1} parent=5 // pred_check_branch
        %313 = sbr.rel (%p310) target = $region44
      $region43: #{tpu_custom_call.1} parent=5 // pred_region
        %s314 = ssub.s32 %s21, 1
        %p315 = scmp.lt.s32.totalorder %s26, 1
        %s316 = scalar_select %p315, %s26, 1
        %s317 = smul.addr %s316, 2
        %s318 = smul.addr %s317, 4
        %s319 = scalar_lea.vmem %s0, %s318
        %p320 = pneg %p47
        %p321 = pneg %p44
        %p322 = scmp.lt.s32.totalorder %s26, 1
        %s323 = scalar_select %p322, %s26, 1
        %s324 = smul.addr %s323, 4
        %s325 = scalar_lea.vmem %s1, %s324
        %p326 = pneg %p73
        %p327 = pneg %p70
        %p328 = pneg %p94
        %p329 = pneg %p91
        %p330 = scmp.lt.s32.totalorder %s26, 1
        %s331 = scalar_select %p330, %s26, 1
        %s332 = smul.addr %s331, 8
        %s333 = scalar_lea.vmem %s3, %s332
        %p334 = pneg %p120
        %p335 = pneg %p117
        %p336 = scmp.lt.s32.totalorder %s26, 1
        %s337 = scalar_select %p336, %s26, 1
        %s338 = smul.addr %s337, 8
        %s339 = scalar_lea.vmem %s4, %s338
        %p340 = pneg %p146
        %p341 = pneg %p143
        %p342 = scmp.lt.s32.totalorder %s26, 1
        %s343 = scalar_select %p342, %s26, 1
        %s344 = smul.addr %s343, 8
        %s345 = scalar_lea.vmem %s5, %s344
        %p346 = pneg %p172
        %p347 = pneg %p169
        %p348 = pneg %p198
        %p349 = pneg %p195
        %s350 = sand.u32 %s185, 1
        %s351 = scalar_lea.sflag [#allocation3], %s350
        %s352 = sand.u32 %s185, 1
        %s353 = scalar_lea.vmem [#allocation2], %s352
        %p354 = pneg %p224
        %p355 = pneg %p221
        %s356 = sand.u32 %s26, 1
        %s357 = scalar_lea.sflag [#allocation5], %s356
        %s358 = sand.u32 %s211, 1
        %s359 = scalar_lea.vmem [#allocation4], %s358
        %p360 = pneg %p250
        %p361 = pneg %p247
        %s362 = sand.u32 %s26, 1
        %s363 = scalar_lea.sflag [#allocation5], %s362
        %s364 = sand.u32 %s237, 1
        %s365 = scalar_lea.vmem [#allocation6], %s364
        %p366 = scmp.lt.s32.totalorder %s26, 1
        %s367 = scalar_select %p366, %s26, 1
        %s368 = smul.addr %s367, 2
        %s369 = smul.addr %s368, 4
        %s370 = scalar_lea.vmem %s0, %s369
        %p371 = scmp.lt.s32.totalorder %s26, 1
        %s372 = scalar_select %p371, %s26, 1
        %s373 = smul.addr %s372, 4
        %s374 = scalar_lea.vmem %s1, %s373
        %p375 = scmp.lt.s32.totalorder %s26, 1
        %s376 = scalar_select %p375, %s26, 1
        %s377 = smul.addr %s376, 8
        %s378 = scalar_lea.vmem %s3, %s377
        %p379 = scmp.lt.s32.totalorder %s26, 1
        %s380 = scalar_select %p379, %s26, 1
        %s381 = smul.addr %s380, 8
        %s382 = scalar_lea.vmem %s4, %s381
        %p383 = scmp.lt.s32.totalorder %s26, 1
        %s384 = scalar_select %p383, %s26, 1
        %s385 = smul.addr %s384, 8
        %s386 = scalar_lea.vmem %s5, %s385
        %v388 = vld [vmem:[%s370] sm:$0xf]
        %v389 = vld [vmem:[%s370 + $0x4] sm:$0xf]
        %v390 = vld [vmem:[%s374] sm:$0xf]
        %v391 = vld [vmem:[%s2] sm:$0x3]
        %v392 = vld [vmem:[%s378] sm:$0xff]
        %v393 = vld [vmem:[%s382] sm:$0xff]
        %v394 = vld [vmem:[%s386] sm:$0xff]
        %396 = vset.pattern.permute.xlu0 0
        %397 = vperm.xlu0 %396, %v393
        %v398 = vpop.permute.xlu0 %397
        %400 = vset.pattern.permute.xlu0 1
        %401 = vperm.xlu0 %400, %v393
        %v402 = vpop.permute.xlu0 %401
        %404 = vset.pattern.permute.xlu0 2
        %405 = vperm.xlu0 %404, %v393
        %v406 = vpop.permute.xlu0 %405
        %408 = vset.pattern.permute.xlu0 3
        %409 = vperm.xlu0 %408, %v393
        %v410 = vpop.permute.xlu0 %409
        %v412 = vperm.slane %v390, 2
        %v413 = vmin.f32 %v406, %v412
        %v414 = vperm.slane %v390, 0
        %v415 = vmax.f32 %v398, %v414
        %v416 = vsub.f32 %v413, %v415
        %v417 = vmax.f32 %v416, 0.0
        %v418 = vperm.slane %v390, 3
        %v419 = vmin.f32 %v410, %v418
        %v420 = vperm.slane %v390, 1
        %v421 = vmax.f32 %v402, %v420
        %v422 = vsub.f32 %v419, %v421
        %v423 = vmax.f32 %v422, 0.0
        %v424 = vmul.f32 %v417, %v423
        %425 = vrot.lane.b32.xlu0 %v393, 2
        %v426 = vpop.permute.xlu0 %425
        %v428 = vsub.f32 %v393, %v426
        %v429 = vmax.f32 %v428, 0.0
        %431 = vrot.lane.b32.xlu0 %v429, 127
        %v432 = vpop.permute.xlu0 %431
        %v434 = vmul.f32 %v429, %v432
        %v436 = vrot.slane %v390, 6
        %v438 = vsub.f32 %v390, %v436
        %v439 = vmax.f32 %v438, 0.0
        %v441 = vrot.slane %v439, 1
        %v443 = vmul.f32 %v439, %v441
        %445 = vset.pattern.permute.xlu0 2
        %446 = vperm.xlu0 %445, %v434
        %v447 = vpop.permute.xlu0 %446
        %v449 = vperm.slane %v443, 2
        %v450 = vadd.f32 %v447, %v449
        %v451 = vsub.f32 %v450, %v424
        %v452 = vadd.f32 %v451, 1e-09
        %v453 = vrcp.pop %v452
        %v454 = vmul.f32 %v452, %v453
        %v455 = vsub.f32 1.0, %v454
        %v456 = vmul.f32 %v453, %v455
        %v457 = vadd.f32 %v453, %v456
        %vm458 = vweird.f32 %v452
        %vm459 = vweird.f32 %v453
        %vm460 = vmor %vm458, %vm459
        %v461 = vsel %vm460, %v453, %v457
        %v462 = vand.u32 2147483647, %v452
        %vm463 = vcmp.eq.f32.partialorder %v462, 8.507059e+37
        %v464 = vand.u32 %v452, 2147483648
        %v465 = vor.u32 1.1754944e-38, %v464
        %v466 = vsel %vm463, %v465, %v461
        %v467 = vmul.f32 %v424, %v466
        %v468 = vlaneseq
        %v469 = vand.u32 %v468, 127
        %470 = vset.pattern.permute.xlu0 0
        %471 = vperm.xlu0 %470, %v392
        %v472 = vpop.permute.xlu0 %471
        %vm473 = vcmp.eq.s32.totalorder %v472, %v469
        %v474 = vsel %vm473, 1.0, 0.0
        %v475 = vpack.c.bf16 %v474, %v474
        %v478 = vunpack.c.l.b16 %v388
        %v479 = vunpack.c.l.b16 %v389
        %v480 = vpack.c.b16 %v479, %v478
        %vm482 = vcmask 130048
        %v484 = vsel %vm482, %v475, 0
        %486 = vmatpush.bf16.msra.mxu0 0
        %487 = vmatpush.bf16.msra.mxu0 0
        %488 = vmatpush.bf16.msra.mxu0 0
        %489 = vmatpush.bf16.msra.mxu0 0
        %490 = vmatpush.bf16.msra.mxu0 0
        %491 = vmatpush.bf16.msra.mxu0 0
        %492 = vmatpush.bf16.msra.mxu0 0
        %493 = vmatpush.bf16.msra.mxu0 %v480
        %494 = vmatmul.bf16.gmra.mxu0 %v484
        %v495 = vpop.f32.mrf.mxu0
        %v496 = vadd.f32 0.0, %v495
        %v497 = vpop.f32.mrf.mxu0
        %498 = vdwg.mxu0
        %v499 = vmul.f32 %v467, %v467
        %v500 = vmul.f32 %v499, %v499
        %v501 = vmul.f32 %v499, %v500
        %v502 = vmul.f32 %v496, %v501
        %v503 = vperm.slane %v391, 0
        %v504 = vsub.f32 %v503, %v398
        %v505 = vperm.slane %v391, 1
        %v506 = vsub.f32 %v505, %v402
        %v507 = vmin.f32 %v504, %v506
        %v508 = vsub.f32 %v406, %v503
        %v509 = vsub.f32 %v410, %v505
        %v510 = vmin.f32 %v508, %v509
        %v511 = vmin.f32 %v507, %v510
        %vm512 = vcmp.gt.f32.partialorder %v511, 1e-09
        %v513 = vsel %vm512, 1, 0
        %v514 = vcvt.s32.f32 %v513
        %vm515 = vcmp.lt.s32.totalorder %v469, 64
        %v516 = vmul.f32 %v502, %v514
        %v517 = vsel %vm515, 1, 0
        %vm518 = vcmp.eq.s32.totalorder %v517, 1
        %v519 = vsel %vm518, %v516, -inf
        %v520 = vsub.s32 127, %v469
        %v522 = vand.u32 %v519, 2147483647
        %vm523 = vcmp.ge.s32.totalorder %v519, 0
        %v524 = vsub.s32 0, %v522
        %v525 = vsel %vm523, %v519, %v524
        %v526 = vand.u32 %v525, 4294967168
        %v527 = vor.u32 %v526, %v520
        %v528 = vand.u32 %v527, 65535
        %v529 = vshra.s32 %v527, 16
        %v530 = vcvt.s32.f32 %v528
        %v531 = vcvt.s32.f32 %v529
        %532 = vmax.xlane.f32.xlu0 %v531
        %v533 = vpop.xlane.xlu0 %532
        %vm534 = vcmp.eq.f32.partialorder %v531, %v533
        %v535 = vsel %vm534, %v530, -inf
        %536 = vmax.xlane.f32.xlu0 %v535
        %v537 = vpop.xlane.xlu0 %536
        %v538 = vcvt.f32.s32 %v537
        %v539 = vcvt.f32.s32 %v533
        %v540 = vshll.u32 %v539, 16
        %v541 = vadd.s32 %v540, %v538
        %vm542 = vcmp.eq.s32.totalorder %v527, %v541
        %v543 = vsel %vm542, 2147483648, %v527
        %v544 = vand.u32 %v543, 65535
        %v545 = vshra.s32 %v543, 16
        %v546 = vcvt.s32.f32 %v544
        %v547 = vcvt.s32.f32 %v545
        %548 = vmax.xlane.f32.xlu0 %v547
        %v549 = vpop.xlane.xlu0 %548
        %vm550 = vcmp.eq.f32.partialorder %v547, %v549
        %v551 = vsel %vm550, %v546, -inf
        %552 = vmax.xlane.f32.xlu0 %v551
        %v553 = vpop.xlane.xlu0 %552
        %v554 = vcvt.f32.s32 %v553
        %v555 = vcvt.f32.s32 %v549
        %v556 = vshll.u32 %v555, 16
        %v557 = vadd.s32 %v556, %v554
        %vm558 = vcmp.eq.s32.totalorder %v543, %v557
        %v559 = vsel %vm558, 2147483648, %v543
        %v560 = vand.u32 %v559, 65535
        %v561 = vshra.s32 %v559, 16
        %v562 = vcvt.s32.f32 %v560
        %v563 = vcvt.s32.f32 %v561
        %564 = vmax.xlane.f32.xlu0 %v563
        %v565 = vpop.xlane.xlu0 %564
        %vm566 = vcmp.eq.f32.partialorder %v563, %v565
        %v567 = vsel %vm566, %v562, -inf
        %568 = vmax.xlane.f32.xlu0 %v567
        %v569 = vpop.xlane.xlu0 %568
        %v570 = vcvt.f32.s32 %v569
        %v571 = vcvt.f32.s32 %v565
        %v572 = vshll.u32 %v571, 16
        %v573 = vadd.s32 %v572, %v570
        %vm574 = vcmp.eq.s32.totalorder %v559, %v573
        %v575 = vsel %vm574, 2147483648, %v559
        %v576 = vand.u32 %v575, 65535
        %v577 = vshra.s32 %v575, 16
        %v578 = vcvt.s32.f32 %v576
        %v579 = vcvt.s32.f32 %v577
        %580 = vmax.xlane.f32.xlu0 %v579
        %v581 = vpop.xlane.xlu0 %580
        %vm582 = vcmp.eq.f32.partialorder %v579, %v581
        %v583 = vsel %vm582, %v578, -inf
        %584 = vmax.xlane.f32.xlu0 %v583
        %v585 = vpop.xlane.xlu0 %584
        %v586 = vcvt.f32.s32 %v585
        %v587 = vcvt.f32.s32 %v581
        %v588 = vshll.u32 %v587, 16
        %v589 = vadd.s32 %v588, %v586
        %vm590 = vcmp.eq.s32.totalorder %v575, %v589
        %v591 = vsel %vm590, 2147483648, %v575
        %v592 = vand.u32 %v591, 65535
        %v593 = vshra.s32 %v591, 16
        %v594 = vcvt.s32.f32 %v592
        %v595 = vcvt.s32.f32 %v593
        %596 = vmax.xlane.f32.xlu0 %v595
        %v597 = vpop.xlane.xlu0 %596
        %vm598 = vcmp.eq.f32.partialorder %v595, %v597
        %v599 = vsel %vm598, %v594, -inf
        %600 = vmax.xlane.f32.xlu0 %v599
        %v601 = vpop.xlane.xlu0 %600
        %v602 = vcvt.f32.s32 %v601
        %v603 = vcvt.f32.s32 %v597
        %v604 = vshll.u32 %v603, 16
        %v605 = vadd.s32 %v604, %v602
        %vm606 = vcmp.eq.s32.totalorder %v591, %v605
        %v607 = vsel %vm606, 2147483648, %v591
        %v608 = vand.u32 %v607, 65535
        %v609 = vshra.s32 %v607, 16
        %v610 = vcvt.s32.f32 %v608
        %v611 = vcvt.s32.f32 %v609
        %612 = vmax.xlane.f32.xlu0 %v611
        %v613 = vpop.xlane.xlu0 %612
        %vm614 = vcmp.eq.f32.partialorder %v611, %v613
        %v615 = vsel %vm614, %v610, -inf
        %616 = vmax.xlane.f32.xlu0 %v615
        %v617 = vpop.xlane.xlu0 %616
        %v618 = vcvt.f32.s32 %v617
        %v619 = vcvt.f32.s32 %v613
        %v620 = vshll.u32 %v619, 16
        %v621 = vadd.s32 %v620, %v618
        %vm622 = vcmp.eq.s32.totalorder %v607, %v621
        %v623 = vsel %vm622, 2147483648, %v607
        %v624 = vand.u32 %v623, 65535
        %v625 = vshra.s32 %v623, 16
        %v626 = vcvt.s32.f32 %v624
        %v627 = vcvt.s32.f32 %v625
        %628 = vmax.xlane.f32.xlu0 %v627
        %v629 = vpop.xlane.xlu0 %628
        %vm630 = vcmp.eq.f32.partialorder %v627, %v629
        %v631 = vsel %vm630, %v626, -inf
        %632 = vmax.xlane.f32.xlu0 %v631
        %v633 = vpop.xlane.xlu0 %632
        %v634 = vcvt.f32.s32 %v633
        %v635 = vcvt.f32.s32 %v629
        %v636 = vshll.u32 %v635, 16
        %v637 = vadd.s32 %v636, %v634
        %vm638 = vcmp.eq.s32.totalorder %v623, %v637
        %v639 = vsel %vm638, 2147483648, %v623
        %v640 = vand.u32 %v639, 65535
        %v641 = vshra.s32 %v639, 16
        %v642 = vcvt.s32.f32 %v640
        %v643 = vcvt.s32.f32 %v641
        %644 = vmax.xlane.f32.xlu0 %v643
        %v645 = vpop.xlane.xlu0 %644
        %vm646 = vcmp.eq.f32.partialorder %v643, %v645
        %v647 = vsel %vm646, %v642, -inf
        %648 = vmax.xlane.f32.xlu0 %v647
        %v649 = vpop.xlane.xlu0 %648
        %v650 = vcvt.f32.s32 %v649
        %v651 = vcvt.f32.s32 %v645
        %v652 = vshll.u32 %v651, 16
        %v653 = vadd.s32 %v652, %v650
        %vm654 = vcmp.eq.s32.totalorder %v639, %v653
        %v655 = vsel %vm654, 2147483648, %v639
        %v656 = vand.u32 %v655, 65535
        %v657 = vshra.s32 %v655, 16
        %v658 = vcvt.s32.f32 %v656
        %v659 = vcvt.s32.f32 %v657
        %660 = vmax.xlane.f32.xlu0 %v659
        %v661 = vpop.xlane.xlu0 %660
        %vm662 = vcmp.eq.f32.partialorder %v659, %v661
        %v663 = vsel %vm662, %v658, -inf
        %664 = vmax.xlane.f32.xlu0 %v663
        %v665 = vpop.xlane.xlu0 %664
        %v666 = vcvt.f32.s32 %v665
        %v667 = vcvt.f32.s32 %v661
        %v668 = vshll.u32 %v667, 16
        %v669 = vadd.s32 %v668, %v666
        %vm670 = vcmp.eq.s32.totalorder %v655, %v669
        %v671 = vsel %vm670, 2147483648, %v655
        %v672 = vand.u32 %v671, 65535
        %v673 = vshra.s32 %v671, 16
        %v674 = vcvt.s32.f32 %v672
        %v675 = vcvt.s32.f32 %v673
        %676 = vmax.xlane.f32.xlu0 %v675
        %v677 = vpop.xlane.xlu0 %676
        %vm678 = vcmp.eq.f32.partialorder %v675, %v677
        %v679 = vsel %vm678, %v674, -inf
        %680 = vmax.xlane.f32.xlu0 %v679
        %v681 = vpop.xlane.xlu0 %680
        %v682 = vcvt.f32.s32 %v681
        %v683 = vcvt.f32.s32 %v677
        %v684 = vshll.u32 %v683, 16
        %v685 = vadd.s32 %v684, %v682
        %vm686 = vcmp.eq.s32.totalorder %v671, %v685
        %v687 = vsel %vm686, 2147483648, %v671
        %v688 = vand.u32 %v687, 65535
        %v689 = vshra.s32 %v687, 16
        %v690 = vcvt.s32.f32 %v688
        %v691 = vcvt.s32.f32 %v689
        %692 = vmax.xlane.f32.xlu0 %v691
        %v693 = vpop.xlane.xlu0 %692
        %vm694 = vcmp.eq.f32.partialorder %v691, %v693
        %v695 = vsel %vm694, %v690, -inf
        %696 = vmax.xlane.f32.xlu0 %v695
        %v697 = vpop.xlane.xlu0 %696
        %v698 = vcvt.f32.s32 %v697
        %v699 = vcvt.f32.s32 %v693
        %v700 = vshll.u32 %v699, 16
        %v701 = vadd.s32 %v700, %v698
        %vm702 = vcmp.eq.s32.totalorder %v687, %v701
        %v703 = vsel %vm702, 2147483648, %v687
        %v704 = vand.u32 %v703, 65535
        %v705 = vshra.s32 %v703, 16
        %v706 = vcvt.s32.f32 %v704
        %v707 = vcvt.s32.f32 %v705
        %708 = vmax.xlane.f32.xlu0 %v707
        %v709 = vpop.xlane.xlu0 %708
        %vm710 = vcmp.eq.f32.partialorder %v707, %v709
        %v711 = vsel %vm710, %v706, -inf
        %712 = vmax.xlane.f32.xlu0 %v711
        %v713 = vpop.xlane.xlu0 %712
        %v714 = vcvt.f32.s32 %v713
        %v715 = vcvt.f32.s32 %v709
        %v716 = vshll.u32 %v715, 16
        %v717 = vadd.s32 %v716, %v714
        %vm718 = vcmp.eq.s32.totalorder %v703, %v717
        %v719 = vsel %vm718, 2147483648, %v703
        %v720 = vand.u32 %v719, 65535
        %v721 = vshra.s32 %v719, 16
        %v722 = vcvt.s32.f32 %v720
        %v723 = vcvt.s32.f32 %v721
        %724 = vmax.xlane.f32.xlu0 %v723
        %v725 = vpop.xlane.xlu0 %724
        %vm726 = vcmp.eq.f32.partialorder %v723, %v725
        %v727 = vsel %vm726, %v722, -inf
        %728 = vmax.xlane.f32.xlu0 %v727
        %v729 = vpop.xlane.xlu0 %728
        %v730 = vcvt.f32.s32 %v729
        %v731 = vcvt.f32.s32 %v725
        %v732 = vshll.u32 %v731, 16
        %v733 = vadd.s32 %v732, %v730
        %vm734 = vcmp.ge.s32.totalorder %v527, %v733
        %v735 = vsel %vm734, 1, 0
        %v736 = vcvt.s32.f32 %v735
        %738 = vset.pattern.permute.xlu0 0
        %739 = vperm.xlu0 %738, %v394
        %v740 = vpop.permute.xlu0 %739
        %v742 = vmul.f32 %v736, %v514
        %v743 = vmul.f32 %v742, %v740
        %v744 = vsel %vm518, %v743, 0.0
        %v745 = vrot.slane %v744, 4
        %v746 = vadd.f32 %v744, %v745
        %v747 = vrot.slane %v746, 2
        %v748 = vadd.f32 %v746, %v747
        %v749 = vrot.slane %v748, 1
        %v750 = vadd.f32 %v748, %v749
        %v751 = vlaneseq
        %v752 = vshrl.u32 %v751, 7
        %v753 = vsub.s32 7, %v752
        %v755 = vand.u32 %v467, 2147483647
        %vm756 = vcmp.ge.s32.totalorder %v467, 0
        %v757 = vsub.s32 0, %v755
        %v758 = vsel %vm756, %v467, %v757
        %v759 = vand.u32 %v758, 4294967288
        %v760 = vor.u32 %v759, %v753
        %v761 = vrot.slane %v760, 4
        %vm762 = vcmp.gt.s32.totalorder %v760, %v761
        %v763 = vsel %vm762, %v760, %v761
        %v764 = vrot.slane %v763, 2
        %vm765 = vcmp.gt.s32.totalorder %v763, %v764
        %v766 = vsel %vm765, %v763, %v764
        %v767 = vrot.slane %v766, 1
        %vm768 = vcmp.gt.s32.totalorder %v766, %v767
        %v769 = vsel %vm768, %v766, %v767
        %vm770 = vcmp.eq.s32.totalorder %v760, %v769
        %v771 = vsel %vm770, 1, 0
        %v772 = vcvt.s32.f32 %v771
        %vm773 = vcmp.gt.f32.partialorder %v750, 1.0
        %v774 = vsel %vm773, 1, 0
        %vm775 = vcmp.eq.s32.totalorder %v774, 1
        %v776 = vsel %vm775, %v772, %v744
        %v777 = vsel %vm773, 1.0, %v750
        %vm778 = vcmp.gt.f32.partialorder %v776, 0.5
        %v779 = vmul.u32 %v752, 16
        %v780 = vadd.s32 %v779, %v472
        %v781 = vsel %vm778, %v780, 128
        %v782 = vrot.slane %v781, 4
        %vm783 = vcmp.lt.s32.totalorder %v781, %v782
        %v784 = vsel %vm783, %v781, %v782
        %v785 = vrot.slane %v784, 2
        %vm786 = vcmp.lt.s32.totalorder %v784, %v785
        %v787 = vsel %vm786, %v784, %v785
        %v788 = vrot.slane %v787, 1
        %vm789 = vcmp.lt.s32.totalorder %v787, %v788
        %v790 = vsel %vm789, %v787, %v788
        %vm791 = vcmp.gt.f32.partialorder %v777, 0.0
        %v792 = vshra.s32 %v790, 4
        %v793 = vsel %vm791, %v792, 0
        %v794 = vand.u32 %v790, 15
        %v795 = vsel %vm791, %v794, 16
        %v796 = vmul.f32 %v502, %v776
        %797 = vmax.xlane.f32.xlu0 %v796
        %v798 = vpop.xlane.xlu0 %797
        %v799 = vmul.f32 %v467, %v776
        %800 = vmax.xlane.f32.xlu0 %v799
        %v801 = vpop.xlane.xlu0 %800
        %v802 = vadd.f32 %v798, 1e-09
        %v803 = vrcp.pop %v802
        %v804 = vmul.f32 %v802, %v803
        %v805 = vsub.f32 1.0, %v804
        %v806 = vmul.f32 %v803, %v805
        %v807 = vadd.f32 %v803, %v806
        %vm808 = vweird.f32 %v802
        %vm809 = vweird.f32 %v803
        %vm810 = vmor %vm808, %vm809
        %v811 = vsel %vm810, %v803, %v807
        %v812 = vand.u32 2147483647, %v802
        %vm813 = vcmp.eq.f32.partialorder %v812, 8.507059e+37
        %v814 = vand.u32 %v802, 2147483648
        %v815 = vor.u32 1.1754944e-38, %v814
        %v816 = vsel %vm813, %v815, %v811
        %v817 = vmul.f32 %v801, %v816
        %v818 = vmul.f32 %v796, %v817
        %v819 = vrot.slane %v818, 4
        %v820 = vmax.f32 %v818, %v819
        %v821 = vrot.slane %v820, 2
        %v822 = vmax.f32 %v820, %v821
        %v823 = vrot.slane %v822, 1
        %v824 = vmax.f32 %v822, %v823
        %825 = vst [vmem:[%s353] sm:$0x1] %v793
        %826 = vst [vmem:[%s359] sm:$0x1] %v795
        %827 = vst [vmem:[%s365] sm:$0x1] %v824
        %s828 = sand.u32 %s185, 1
        %s829 = scalar_lea.sflag [#allocation3], %s828
        %s830 = sand.u32 %s185, 1
        %s831 = scalar_lea.vmem [#allocation2], %s830
        %s832 = sand.u32 %s26, 1
        %s833 = scalar_lea.sflag [#allocation5], %s832
        %s834 = sand.u32 %s211, 1
        %s835 = scalar_lea.vmem [#allocation4], %s834
        %s836 = sand.u32 %s26, 1
        %s837 = scalar_lea.sflag [#allocation5], %s836
        %s838 = sand.u32 %s237, 1
        %s839 = scalar_lea.vmem [#allocation6], %s838
        // Predicated region
        $region45: #{tpu_custom_call.1} parent=43 // pred_check
          %p840 = pneg %p195
        $region46: #{tpu_custom_call.1} parent=43 // pred_check_branch
          %842 = sbr.rel (%p840) target = $region48
        $region47: #{tpu_custom_call.1} parent=43 // pred_region
          %844 = vsyncadd %s829, 0
          %s845 = scalar_lea.hbm %s6, %s26
          %s847 = sshll.u32 %s831, 4
          %s848 = int_to_ptr.vmem [resolvable:$true] %s847
          %s849 = sshll.u32 %s845, 4
          %s850 = int_to_ptr.hbm [resolvable:$true] %s849
          %852 = dma.vmem_to_hbm [thread:$0]  %s848, 16, %s850, %s829
        $region48: #{tpu_custom_call.1} parent=43 // pred_fallthru
          _
        // Predicated region
        $region49: #{tpu_custom_call.1} parent=43 // pred_check
          %p853 = pneg %p221
        $region50: #{tpu_custom_call.1} parent=43 // pred_check_branch
          %855 = sbr.rel (%p853) target = $region52
        $region51: #{tpu_custom_call.1} parent=43 // pred_region
          %857 = vsyncadd %s833, 0
          %s858 = scalar_lea.hbm %s7, %s26
          %s860 = sshll.u32 %s835, 4
          %s861 = int_to_ptr.vmem [resolvable:$true] %s860
          %s862 = sshll.u32 %s858, 4
          %s863 = int_to_ptr.hbm [resolvable:$true] %s862
          %865 = dma.vmem_to_hbm [thread:$0]  %s861, 16, %s863, %s833
        $region52: #{tpu_custom_call.1} parent=43 // pred_fallthru
          _
        // Predicated region
        $region53: #{tpu_custom_call.1} parent=43 // pred_check
          %p866 = pneg %p247
        $region54: #{tpu_custom_call.1} parent=43 // pred_check_branch
          %868 = sbr.rel (%p866) target = $region56
        $region55: #{tpu_custom_call.1} parent=43 // pred_region
          %870 = vsyncadd %s837, 0
          %s871 = scalar_lea.hbm %s8, %s26
          %s873 = sshll.u32 %s839, 4
          %s874 = int_to_ptr.vmem [resolvable:$true] %s873
          %s875 = sshll.u32 %s871, 4
          %s876 = int_to_ptr.hbm [resolvable:$true] %s875
          %878 = dma.vmem_to_hbm [thread:$0]  %s874, 16, %s876, %s837
        $region56: #{tpu_custom_call.1} parent=43 // pred_fallthru
          _
      $region44: #{tpu_custom_call.1} parent=5 // pred_fallthru
        _
      %p879 = scmp.le.s32.totalorder 2, %s21
      // Predicated region
      $region57: #{tpu_custom_call.1} parent=5 // pred_check
        %p880 = pneg %p879
      $region58: #{tpu_custom_call.1} parent=5 // pred_check_branch
        %882 = sbr.rel (%p880) target = $region60
      $region59: #{tpu_custom_call.1} parent=5 // pred_region
        %s883 = ssub.s32 %s21, 2
        // Predicated region
        $region61: #{tpu_custom_call.1} parent=59 // pred_check
          %p884 = pneg %p201
        $region62: #{tpu_custom_call.1} parent=59 // pred_check_branch
          %886 = sbr.rel (%p884) target = $region64
        $region63: #{tpu_custom_call.1} parent=59 // pred_region
          %s887 = sand.u32 %s186, 1
          %s888 = scalar_lea.sflag [#allocation3], %s887
          %s889 = sand.u32 %s186, 1
          %s890 = scalar_lea.vmem [#allocation2], %s889
          %892 = dma.done %s888, 16
        $region64: #{tpu_custom_call.1} parent=59 // pred_fallthru
          _
        // Predicated region
        $region65: #{tpu_custom_call.1} parent=59 // pred_check
          %p893 = pneg %p227
        $region66: #{tpu_custom_call.1} parent=59 // pred_check_branch
          %895 = sbr.rel (%p893) target = $region68
        $region67: #{tpu_custom_call.1} parent=59 // pred_region
          %s896 = sand.u32 %s27, 1
          %s897 = scalar_lea.sflag [#allocation5], %s896
          %s898 = sand.u32 %s212, 1
          %s899 = scalar_lea.vmem [#allocation4], %s898
          %901 = dma.done %s897, 16
        $region68: #{tpu_custom_call.1} parent=59 // pred_fallthru
          _
        // Predicated region
        $region69: #{tpu_custom_call.1} parent=59 // pred_check
          %p902 = pneg %p253
        $region70: #{tpu_custom_call.1} parent=59 // pred_check_branch
          %904 = sbr.rel (%p902) target = $region72
        $region71: #{tpu_custom_call.1} parent=59 // pred_region
          %s905 = sand.u32 %s27, 1
          %s906 = scalar_lea.sflag [#allocation5], %s905
          %s907 = sand.u32 %s238, 1
          %s908 = scalar_lea.vmem [#allocation6], %s907
          %910 = dma.done %s906, 16
        $region72: #{tpu_custom_call.1} parent=59 // pred_fallthru
          _
      $region60: #{tpu_custom_call.1} parent=5 // pred_fallthru
        _
    $region6: #{tpu_custom_call.1} parent=1 // loop_footer
      %s25 = sadd.s32 1, %s21
    $region7: #{tpu_custom_call.1} parent=1 // loop_footer_branch
      %20 = sbr.rel target = $region3
    $region8: #{tpu_custom_call.1} parent=1 // loop_exit
      _
    %911 = vsyncpa [#allocation3], 1
    %s912 = scalar_lea.sflag [#allocation3], 1
    %913 = vsyncpa %s912, 1
    %914 = vsyncpa [#allocation5], 1
    %s915 = scalar_lea.sflag [#allocation5], 1
    %916 = vsyncpa %s915, 1

</llo_original>
